<compile_context>
chip_gen: v7x
topology: tpu7x:2x2x1
jax: 0.10.0
libtpu: 0.0.40
codegen_flags: <defaults>
</compile_context>

<pallas_src>
import numpy as np
import jax
import jax.numpy as jnp
from jax.experimental import pallas as pl
from jax.experimental.pallas import tpu as pltpu

# ----- config (mirrors the module's __init__ arguments) -----
B, H, W = 2, 16, 16
CIN = 4              # in_channels
C1, C2 = 8, 8        # channels = [8, 8]
K1, K2 = 3, 5        # kernel_sizes = [3, 5]  (odd, as asserted in the module)
P1, P2 = (K1 - 1) // 2, (K2 - 1) // 2
BH = B * H           # batch folded into matmul M axis


def resblock_kernel(x_ref, w1_ref, b1_ref, w2_ref, b2_ref, ws_ref, o_ref,
                    xpad_ref, h1pad_ref):
    # x_ref: (B, H, W*CIN) lane-packed input (NHWC with W,C merged into lanes)

    # ---- stage x into an H-zero-padded scratch (zero halo rows only) ----
    xpad_ref[:, 0:P1, :] = jnp.zeros((B, P1, W * CIN), jnp.float32)
    xpad_ref[:, P1 + H:2 * P1 + H, :] = jnp.zeros((B, P1, W * CIN), jnp.float32)
    xpad_ref[:, P1:P1 + H, :] = x_ref[...]

    # ---- conv1: K1 row-tap matmuls against banded (W*CIN, W*C1) weights ----
    acc1 = jnp.zeros((BH, W * C1), jnp.float32)
    for kh in range(K1):
        patch = xpad_ref[:, kh:kh + H, :].reshape(BH, W * CIN)
        acc1 = acc1 + jnp.dot(patch, w1_ref[kh],
                              preferred_element_type=jnp.float32)
    h1 = jnp.maximum(acc1 + b1_ref[...], 0.0)            # bias + ReLU, (BH, 128)

    # ---- stage h1 into an H-zero-padded scratch for conv2 ----
    h1pad_ref[:, 0:P2, :] = jnp.zeros((B, P2, W * C1), jnp.float32)
    h1pad_ref[:, P2 + H:2 * P2 + H, :] = jnp.zeros((B, P2, W * C1), jnp.float32)
    h1pad_ref[:, P2:P2 + H, :] = h1.reshape(B, H, W * C1)

    # ---- conv2: K2 row-tap matmuls + bias ----
    acc2 = jnp.zeros((BH, W * C2), jnp.float32)
    for kh in range(K2):
        patch = h1pad_ref[:, kh:kh + H, :].reshape(BH, W * C1)
        acc2 = acc2 + jnp.dot(patch, w2_ref[kh],
                              preferred_element_type=jnp.float32)
    out = acc2 + b2_ref[...]

    # ---- 1x1 shortcut (block-diagonal banded, no bias) + residual ReLU ----
    out = out + jnp.dot(x_ref[...].reshape(BH, W * CIN), ws_ref[...],
                        preferred_element_type=jnp.float32)
    out = jnp.maximum(out, 0.0)

    o_ref[...] = out.reshape(B, H, W * C2).astype(o_ref.dtype)


# ----- one-time host-side weight repacking (glue, outside the hot path) -----
def _conv_band_weights(w_oihw, pad, width):
    """OIHW conv weights -> (K, width*Cin, width*Cout) banded matrices that
    encode the W-dimension taps (including W-boundary zero padding)."""
    w = np.asarray(w_oihw, np.float32)
    cout, cin, k, _ = w.shape
    band = np.zeros((k, width * cin, width * cout), np.float32)
    for kh in range(k):
        for kw in range(k):
            blk = w[:, :, kh, kw].T                       # (Cin, Cout)
            for wo in range(width):
                wi = wo + kw - pad
                if 0 <= wi < width:
                    band[kh, wi * cin:(wi + 1) * cin,
                         wo * cout:(wo + 1) * cout] = blk
    return jnp.asarray(band)


def _shortcut_band(ws_oihw, width):
    w = np.asarray(ws_oihw, np.float32)[:, :, 0, 0]       # (Cout, Cin)
    cout, cin = w.shape
    band = np.zeros((width * cin, width * cout), np.float32)
    for wo in range(width):
        band[wo * cin:(wo + 1) * cin, wo * cout:(wo + 1) * cout] = w.T
    return jnp.asarray(band)


def pack_params(params):
    w1, b1, w2, b2, ws = params
    w1b = _conv_band_weights(w1, P1, W)                   # (K1, W*CIN, W*C1)
    w2b = _conv_band_weights(w2, P2, W)                   # (K2, W*C1, W*C2)
    wsb = _shortcut_band(ws, W)                           # (W*CIN, W*C2)
    b1p = jnp.asarray(np.tile(np.asarray(b1, np.float32), W).reshape(1, W * C1))
    b2p = jnp.asarray(np.tile(np.asarray(b2, np.float32), W).reshape(1, W * C2))
    return (w1b, b1p, w2b, b2p, wsb)


def residual_block(x_nchw, packed_params):
    """Forward pass equivalent to ResidualBlock.forward (NCHW in / NCHW out)."""
    w1b, b1p, w2b, b2p, wsb = packed_params

    # interface glue: NCHW -> lane-packed (B, H, W*CIN)
    x_pk = jnp.transpose(x_nchw, (0, 2, 3, 1)).reshape(B, H, W * CIN)

    out_pk = pl.pallas_call(
        resblock_kernel,
        out_shape=jax.ShapeDtypeStruct((B, H, W * C2), jnp.float32),
        grid_spec=pltpu.PrefetchScalarGridSpec(
            num_scalar_prefetch=0,
            grid=(1,),
            in_specs=[
                pl.BlockSpec((B, H, W * CIN), lambda i: (0, 0, 0)),
                pl.BlockSpec((K1, W * CIN, W * C1), lambda i: (0, 0, 0)),
                pl.BlockSpec((1, W * C1), lambda i: (0, 0)),
                pl.BlockSpec((K2, W * C1, W * C2), lambda i: (0, 0, 0)),
                pl.BlockSpec((1, W * C2), lambda i: (0, 0)),
                pl.BlockSpec((W * CIN, W * C2), lambda i: (0, 0)),
            ],
            out_specs=pl.BlockSpec((B, H, W * C2), lambda i: (0, 0, 0)),
            scratch_shapes=[
                pltpu.VMEM((B, H + 2 * P1, W * CIN), jnp.float32),  # conv1 H-pad
                pltpu.VMEM((B, H + 2 * P2, W * C1), jnp.float32),   # conv2 H-pad
            ],
        ),
        compiler_params=pltpu.CompilerParams(
            dimension_semantics=("arbitrary",)),
    )(x_pk, w1b, b1p, w2b, b2p, wsb)

    # lane-packed -> NCHW
    return jnp.transpose(out_pk.reshape(B, H, W, C2), (0, 3, 1, 2))


def reference(x, params):
    """Pure-JAX reference (matches PyTorch semantics) for correctness check."""
    w1, b1, w2, b2, ws = params

    def conv(x, w, pad):
        return jax.lax.conv_general_dilated(
            x, w, (1, 1), [(pad, pad), (pad, pad)],
            dimension_numbers=('NCHW', 'OIHW', 'NCHW'))

    h = jax.nn.relu(conv(x, w1, P1) + b1[None, :, None, None])
    out = conv(h, w2, P2) + b2[None, :, None, None]
    out = out + conv(x, ws, 0)
    return jax.nn.relu(out)


if __name__ == "__main__":
    key = jax.random.PRNGKey(0)
    ks = jax.random.split(key, 6)
    # deterministic synthetic parameters (shapes from ResidualBlock.__init__)
    x = jax.random.normal(ks[0], (B, CIN, H, W), jnp.float32)
    w1 = jax.random.normal(ks[1], (C1, CIN, K1, K1), jnp.float32) * 0.1
    b1 = jax.random.normal(ks[2], (C1,), jnp.float32) * 0.1
    w2 = jax.random.normal(ks[3], (C2, C1, K2, K2), jnp.float32) * 0.1
    b2 = jax.random.normal(ks[4], (C2,), jnp.float32) * 0.1
    ws = jax.random.normal(ks[5], (C2, CIN, 1, 1), jnp.float32) * 0.1
    params = (w1, b1, w2, b2, ws)

    packed = pack_params(params)      # one-time host-side weight repack
    out = residual_block(x, packed)
    jax.block_until_ready(out)

    ref = reference(x, params)
    assert out.shape == (B, C2, H, W), out.shape
    assert jnp.allclose(out, ref, rtol=1e-3, atol=1e-3), float(
        jnp.max(jnp.abs(out - ref)))
    print("KERNEL_OK")
</pallas_src>

<mosaic_0001>
module attributes {stable_mosaic.version = 11 : i64} {
  func.func @resblock_kernel(%arg0: i32, %arg1: memref<2x16x64xf32, #tpu.memory_space<vmem>>, %arg2: memref<3x64x128xf32, #tpu.memory_space<vmem>>, %arg3: memref<1x128xf32, #tpu.memory_space<vmem>>, %arg4: memref<5x128x128xf32, #tpu.memory_space<vmem>>, %arg5: memref<1x128xf32, #tpu.memory_space<vmem>>, %arg6: memref<64x128xf32, #tpu.memory_space<vmem>>, %arg7: memref<2x16x128xf32, #tpu.memory_space<vmem>>, %arg8: memref<2x18x64xf32, #tpu.memory_space<vmem>>, %arg9: memref<2x20x128xf32, #tpu.memory_space<vmem>>) attributes {dimension_semantics = [#tpu.dimension_semantics<arbitrary>], iteration_bounds = array<i64: 1>, scalar_prefetch = 0 : i64, scratch_operands = 2 : i64, tpu.core_type = #tpu.core_type<tc>, window_params = [{pipeline_mode = #tpu.pipeline_mode<synchronous>, transform_indices = @transform_0, window_bounds = array<i64: 2, 16, 64>}, {pipeline_mode = #tpu.pipeline_mode<synchronous>, transform_indices = @transform_1, window_bounds = array<i64: 3, 64, 128>}, {pipeline_mode = #tpu.pipeline_mode<synchronous>, transform_indices = @transform_2, window_bounds = array<i64: 1, 128>}, {pipeline_mode = #tpu.pipeline_mode<synchronous>, transform_indices = @transform_3, window_bounds = array<i64: 5, 128, 128>}, {pipeline_mode = #tpu.pipeline_mode<synchronous>, transform_indices = @transform_4, window_bounds = array<i64: 1, 128>}, {pipeline_mode = #tpu.pipeline_mode<synchronous>, transform_indices = @transform_5, window_bounds = array<i64: 64, 128>}, {pipeline_mode = #tpu.pipeline_mode<synchronous>, transform_indices = @transform_6, window_bounds = array<i64: 2, 16, 128>}]} {
    %cst = arith.constant 0.000000e+00 : f32
    %0 = vector.broadcast %cst : f32 to vector<2x1x64xf32>
    %c0 = arith.constant 0 : index
    %c0_0 = arith.constant 0 : index
    %c0_1 = arith.constant 0 : index
    %1 = vector.load %arg8[%c0, %c0_0, %c0_1] : memref<2x18x64xf32, #tpu.memory_space<vmem>>, vector<2x1x64xf32>
    tpu.vector_store %arg8[%c0, %c0_0, %c0_1], %0 {strides = array<i32>} : memref<2x18x64xf32, #tpu.memory_space<vmem>>, vector<2x1x64xf32>,
    %cst_2 = arith.constant 0.000000e+00 : f32
    %2 = vector.broadcast %cst_2 : f32 to vector<2x1x64xf32>
    %c0_3 = arith.constant 0 : index
    %c17 = arith.constant 17 : index
    %c0_4 = arith.constant 0 : index
    %3 = vector.load %arg8[%c0_3, %c17, %c0_4] : memref<2x18x64xf32, #tpu.memory_space<vmem>>, vector<2x1x64xf32>
    tpu.vector_store %arg8[%c0_3, %c17, %c0_4], %2 {strides = array<i32>} : memref<2x18x64xf32, #tpu.memory_space<vmem>>, vector<2x1x64xf32>,
    %c0_5 = arith.constant 0 : index
    %c0_6 = arith.constant 0 : index
    %c0_7 = arith.constant 0 : index
    %4 = vector.load %arg1[%c0_5, %c0_6, %c0_7] : memref<2x16x64xf32, #tpu.memory_space<vmem>>, vector<2x16x64xf32>
    %c0_8 = arith.constant 0 : index
    %c1 = arith.constant 1 : index
    %c0_9 = arith.constant 0 : index
    %5 = vector.load %arg8[%c0_8, %c1, %c0_9] : memref<2x18x64xf32, #tpu.memory_space<vmem>>, vector<2x16x64xf32>
    tpu.vector_store %arg8[%c0_8, %c1, %c0_9], %4 {strides = array<i32>} : memref<2x18x64xf32, #tpu.memory_space<vmem>>, vector<2x16x64xf32>,
    %cst_10 = arith.constant 0.000000e+00 : f32
    %6 = vector.broadcast %cst_10 : f32 to vector<32x128xf32>
    %c0_11 = arith.constant 0 : index
    %c0_12 = arith.constant 0 : index
    %c0_13 = arith.constant 0 : index
    %7 = vector.load %arg8[%c0_11, %c0_12, %c0_13] : memref<2x18x64xf32, #tpu.memory_space<vmem>>, vector<2x16x64xf32>
    %8 = vector.shape_cast %7 : vector<2x16x64xf32> to vector<32x64xf32>
    %c0_14 = arith.constant 0 : index
    %c0_15 = arith.constant 0 : index
    %c0_16 = arith.constant 0 : index
    %9 = vector.load %arg2[%c0_14, %c0_15, %c0_16] : memref<3x64x128xf32, #tpu.memory_space<vmem>>, vector<1x64x128xf32>
    %10 = vector.shape_cast %9 : vector<1x64x128xf32> to vector<64x128xf32>
    %cst_17 = arith.constant dense<0.000000e+00> : vector<32x128xf32>
    %11 = tpu.matmul %8, %10, %cst_17 {dimension_numbers = #tpu.dot_dimension_numbers<[1], [0], [0], [1], [0, 0, 1, 1], [], []>} : vector<32x64xf32>, vector<64x128xf32>, vector<32x128xf32> -> vector<32x128xf32>
    %12 = arith.addf %6, %11 : vector<32x128xf32>
    %c0_18 = arith.constant 0 : index
    %c1_19 = arith.constant 1 : index
    %c0_20 = arith.constant 0 : index
    %13 = vector.load %arg8[%c0_18, %c1_19, %c0_20] : memref<2x18x64xf32, #tpu.memory_space<vmem>>, vector<2x16x64xf32>
    %14 = vector.shape_cast %13 : vector<2x16x64xf32> to vector<32x64xf32>
    %c1_21 = arith.constant 1 : index
    %c0_22 = arith.constant 0 : index
    %c0_23 = arith.constant 0 : index
    %15 = vector.load %arg2[%c1_21, %c0_22, %c0_23] : memref<3x64x128xf32, #tpu.memory_space<vmem>>, vector<1x64x128xf32>
    %16 = vector.shape_cast %15 : vector<1x64x128xf32> to vector<64x128xf32>
    %cst_24 = arith.constant dense<0.000000e+00> : vector<32x128xf32>
    %17 = tpu.matmul %14, %16, %cst_24 {dimension_numbers = #tpu.dot_dimension_numbers<[1], [0], [0], [1], [0, 0, 1, 1], [], []>} : vector<32x64xf32>, vector<64x128xf32>, vector<32x128xf32> -> vector<32x128xf32>
    %18 = arith.addf %12, %17 : vector<32x128xf32>
    %c0_25 = arith.constant 0 : index
    %c2 = arith.constant 2 : index
    %c0_26 = arith.constant 0 : index
    %19 = vector.load %arg8[%c0_25, %c2, %c0_26] : memref<2x18x64xf32, #tpu.memory_space<vmem>>, vector<2x16x64xf32>
    %20 = vector.shape_cast %19 : vector<2x16x64xf32> to vector<32x64xf32>
    %c2_27 = arith.constant 2 : index
    %c0_28 = arith.constant 0 : index
    %c0_29 = arith.constant 0 : index
    %21 = vector.load %arg2[%c2_27, %c0_28, %c0_29] : memref<3x64x128xf32, #tpu.memory_space<vmem>>, vector<1x64x128xf32>
    %22 = vector.shape_cast %21 : vector<1x64x128xf32> to vector<64x128xf32>
    %cst_30 = arith.constant dense<0.000000e+00> : vector<32x128xf32>
    %23 = tpu.matmul %20, %22, %cst_30 {dimension_numbers = #tpu.dot_dimension_numbers<[1], [0], [0], [1], [0, 0, 1, 1], [], []>} : vector<32x64xf32>, vector<64x128xf32>, vector<32x128xf32> -> vector<32x128xf32>
    %24 = arith.addf %18, %23 : vector<32x128xf32>
    %c0_31 = arith.constant 0 : index
    %c0_32 = arith.constant 0 : index
    %25 = vector.load %arg3[%c0_31, %c0_32] : memref<1x128xf32, #tpu.memory_space<vmem>>, vector<1x128xf32>
    %26 = vector.broadcast %25 : vector<1x128xf32> to vector<32x128xf32>
    %27 = arith.addf %24, %26 : vector<32x128xf32>
    %cst_33 = arith.constant 0.000000e+00 : f32
    %28 = vector.broadcast %cst_33 : f32 to vector<32x128xf32>
    %29 = arith.maximumf %27, %28 : vector<32x128xf32>
    %cst_34 = arith.constant 0.000000e+00 : f32
    %30 = vector.broadcast %cst_34 : f32 to vector<2x2x128xf32>
    %c0_35 = arith.constant 0 : index
    %c0_36 = arith.constant 0 : index
    %c0_37 = arith.constant 0 : index
    %31 = vector.load %arg9[%c0_35, %c0_36, %c0_37] : memref<2x20x128xf32, #tpu.memory_space<vmem>>, vector<2x2x128xf32>
    tpu.vector_store %arg9[%c0_35, %c0_36, %c0_37], %30 {strides = array<i32>} : memref<2x20x128xf32, #tpu.memory_space<vmem>>, vector<2x2x128xf32>,
    %cst_38 = arith.constant 0.000000e+00 : f32
    %32 = vector.broadcast %cst_38 : f32 to vector<2x2x128xf32>
    %c0_39 = arith.constant 0 : index
    %c18 = arith.constant 18 : index
    %c0_40 = arith.constant 0 : index
    %33 = vector.load %arg9[%c0_39, %c18, %c0_40] : memref<2x20x128xf32, #tpu.memory_space<vmem>>, vector<2x2x128xf32>
    tpu.vector_store %arg9[%c0_39, %c18, %c0_40], %32 {strides = array<i32>} : memref<2x20x128xf32, #tpu.memory_space<vmem>>, vector<2x2x128xf32>,
    %34 = vector.shape_cast %29 : vector<32x128xf32> to vector<2x16x128xf32>
    %c0_41 = arith.constant 0 : index
    %c2_42 = arith.constant 2 : index
    %c0_43 = arith.constant 0 : index
    %35 = vector.load %arg9[%c0_41, %c2_42, %c0_43] : memref<2x20x128xf32, #tpu.memory_space<vmem>>, vector<2x16x128xf32>
    tpu.vector_store %arg9[%c0_41, %c2_42, %c0_43], %34 {strides = array<i32>} : memref<2x20x128xf32, #tpu.memory_space<vmem>>, vector<2x16x128xf32>,
    %cst_44 = arith.constant 0.000000e+00 : f32
    %36 = vector.broadcast %cst_44 : f32 to vector<32x128xf32>
    %c0_45 = arith.constant 0 : index
    %c0_46 = arith.constant 0 : index
    %c0_47 = arith.constant 0 : index
    %37 = vector.load %arg9[%c0_45, %c0_46, %c0_47] : memref<2x20x128xf32, #tpu.memory_space<vmem>>, vector<2x16x128xf32>
    %38 = vector.shape_cast %37 : vector<2x16x128xf32> to vector<32x128xf32>
    %c0_48 = arith.constant 0 : index
    %c0_49 = arith.constant 0 : index
    %c0_50 = arith.constant 0 : index
    %39 = vector.load %arg4[%c0_48, %c0_49, %c0_50] : memref<5x128x128xf32, #tpu.memory_space<vmem>>, vector<1x128x128xf32>
    %40 = vector.shape_cast %39 : vector<1x128x128xf32> to vector<128x128xf32>
    %cst_51 = arith.constant dense<0.000000e+00> : vector<32x128xf32>
    %41 = tpu.matmul %38, %40, %cst_51 {dimension_numbers = #tpu.dot_dimension_numbers<[1], [0], [0], [1], [0, 0, 1, 1], [], []>} : vector<32x128xf32>, vector<128x128xf32>, vector<32x128xf32> -> vector<32x128xf32>
    %42 = arith.addf %36, %41 : vector<32x128xf32>
    %c0_52 = arith.constant 0 : index
    %c1_53 = arith.constant 1 : index
    %c0_54 = arith.constant 0 : index
    %43 = vector.load %arg9[%c0_52, %c1_53, %c0_54] : memref<2x20x128xf32, #tpu.memory_space<vmem>>, vector<2x16x128xf32>
    %44 = vector.shape_cast %43 : vector<2x16x128xf32> to vector<32x128xf32>
    %c1_55 = arith.constant 1 : index
    %c0_56 = arith.constant 0 : index
    %c0_57 = arith.constant 0 : index
    %45 = vector.load %arg4[%c1_55, %c0_56, %c0_57] : memref<5x128x128xf32, #tpu.memory_space<vmem>>, vector<1x128x128xf32>
    %46 = vector.shape_cast %45 : vector<1x128x128xf32> to vector<128x128xf32>
    %cst_58 = arith.constant dense<0.000000e+00> : vector<32x128xf32>
    %47 = tpu.matmul %44, %46, %cst_58 {dimension_numbers = #tpu.dot_dimension_numbers<[1], [0], [0], [1], [0, 0, 1, 1], [], []>} : vector<32x128xf32>, vector<128x128xf32>, vector<32x128xf32> -> vector<32x128xf32>
    %48 = arith.addf %42, %47 : vector<32x128xf32>
    %c0_59 = arith.constant 0 : index
    %c2_60 = arith.constant 2 : index
    %c0_61 = arith.constant 0 : index
    %49 = vector.load %arg9[%c0_59, %c2_60, %c0_61] : memref<2x20x128xf32, #tpu.memory_space<vmem>>, vector<2x16x128xf32>
    %50 = vector.shape_cast %49 : vector<2x16x128xf32> to vector<32x128xf32>
    %c2_62 = arith.constant 2 : index
    %c0_63 = arith.constant 0 : index
    %c0_64 = arith.constant 0 : index
    %51 = vector.load %arg4[%c2_62, %c0_63, %c0_64] : memref<5x128x128xf32, #tpu.memory_space<vmem>>, vector<1x128x128xf32>
    %52 = vector.shape_cast %51 : vector<1x128x128xf32> to vector<128x128xf32>
    %cst_65 = arith.constant dense<0.000000e+00> : vector<32x128xf32>
    %53 = tpu.matmul %50, %52, %cst_65 {dimension_numbers = #tpu.dot_dimension_numbers<[1], [0], [0], [1], [0, 0, 1, 1], [], []>} : vector<32x128xf32>, vector<128x128xf32>, vector<32x128xf32> -> vector<32x128xf32>
    %54 = arith.addf %48, %53 : vector<32x128xf32>
    %c0_66 = arith.constant 0 : index
    %c3 = arith.constant 3 : index
    %c0_67 = arith.constant 0 : index
    %55 = vector.load %arg9[%c0_66, %c3, %c0_67] : memref<2x20x128xf32, #tpu.memory_space<vmem>>, vector<2x16x128xf32>
    %56 = vector.shape_cast %55 : vector<2x16x128xf32> to vector<32x128xf32>
    %c3_68 = arith.constant 3 : index
    %c0_69 = arith.constant 0 : index
    %c0_70 = arith.constant 0 : index
    %57 = vector.load %arg4[%c3_68, %c0_69, %c0_70] : memref<5x128x128xf32, #tpu.memory_space<vmem>>, vector<1x128x128xf32>
    %58 = vector.shape_cast %57 : vector<1x128x128xf32> to vector<128x128xf32>
    %cst_71 = arith.constant dense<0.000000e+00> : vector<32x128xf32>
    %59 = tpu.matmul %56, %58, %cst_71 {dimension_numbers = #tpu.dot_dimension_numbers<[1], [0], [0], [1], [0, 0, 1, 1], [], []>} : vector<32x128xf32>, vector<128x128xf32>, vector<32x128xf32> -> vector<32x128xf32>
    %60 = arith.addf %54, %59 : vector<32x128xf32>
    %c0_72 = arith.constant 0 : index
    %c4 = arith.constant 4 : index
    %c0_73 = arith.constant 0 : index
    %61 = vector.load %arg9[%c0_72, %c4, %c0_73] : memref<2x20x128xf32, #tpu.memory_space<vmem>>, vector<2x16x128xf32>
    %62 = vector.shape_cast %61 : vector<2x16x128xf32> to vector<32x128xf32>
    %c4_74 = arith.constant 4 : index
    %c0_75 = arith.constant 0 : index
    %c0_76 = arith.constant 0 : index
    %63 = vector.load %arg4[%c4_74, %c0_75, %c0_76] : memref<5x128x128xf32, #tpu.memory_space<vmem>>, vector<1x128x128xf32>
    %64 = vector.shape_cast %63 : vector<1x128x128xf32> to vector<128x128xf32>
    %cst_77 = arith.constant dense<0.000000e+00> : vector<32x128xf32>
    %65 = tpu.matmul %62, %64, %cst_77 {dimension_numbers = #tpu.dot_dimension_numbers<[1], [0], [0], [1], [0, 0, 1, 1], [], []>} : vector<32x128xf32>, vector<128x128xf32>, vector<32x128xf32> -> vector<32x128xf32>
    %66 = arith.addf %60, %65 : vector<32x128xf32>
    %c0_78 = arith.constant 0 : index
    %c0_79 = arith.constant 0 : index
    %67 = vector.load %arg5[%c0_78, %c0_79] : memref<1x128xf32, #tpu.memory_space<vmem>>, vector<1x128xf32>
    %68 = vector.broadcast %67 : vector<1x128xf32> to vector<32x128xf32>
    %69 = arith.addf %66, %68 : vector<32x128xf32>
    %c0_80 = arith.constant 0 : index
    %c0_81 = arith.constant 0 : index
    %c0_82 = arith.constant 0 : index
    %70 = vector.load %arg1[%c0_80, %c0_81, %c0_82] : memref<2x16x64xf32, #tpu.memory_space<vmem>>, vector<2x16x64xf32>
    %71 = vector.shape_cast %70 : vector<2x16x64xf32> to vector<32x64xf32>
    %c0_83 = arith.constant 0 : index
    %c0_84 = arith.constant 0 : index
    %72 = vector.load %arg6[%c0_83, %c0_84] : memref<64x128xf32, #tpu.memory_space<vmem>>, vector<64x128xf32>
    %cst_85 = arith.constant dense<0.000000e+00> : vector<32x128xf32>
    %73 = tpu.matmul %71, %72, %cst_85 {dimension_numbers = #tpu.dot_dimension_numbers<[1], [0], [0], [1], [0, 0, 1, 1], [], []>} : vector<32x64xf32>, vector<64x128xf32>, vector<32x128xf32> -> vector<32x128xf32>
    %74 = arith.addf %69, %73 : vector<32x128xf32>
    %cst_86 = arith.constant 0.000000e+00 : f32
    %75 = vector.broadcast %cst_86 : f32 to vector<32x128xf32>
    %76 = arith.maximumf %74, %75 : vector<32x128xf32>
    %77 = vector.shape_cast %76 : vector<32x128xf32> to vector<2x16x128xf32>
    %c0_87 = arith.constant 0 : index
    %c0_88 = arith.constant 0 : index
    %c0_89 = arith.constant 0 : index
    %78 = vector.load %arg7[%c0_87, %c0_88, %c0_89] : memref<2x16x128xf32, #tpu.memory_space<vmem>>, vector<2x16x128xf32>
    tpu.vector_store %arg7[%c0_87, %c0_88, %c0_89], %77 {strides = array<i32>} : memref<2x16x128xf32, #tpu.memory_space<vmem>>, vector<2x16x128xf32>,
    return
  }
  func.func @transform_0(%arg0: i32) -> (i32, i32, i32) {
    %c0_i32 = arith.constant 0 : i32
    %c0_i32_0 = arith.constant 0 : i32
    %c0_i32_1 = arith.constant 0 : i32
    %c0_i32_2 = arith.constant 0 : i32
    return %c0_i32, %c0_i32_0, %c0_i32_1 : i32, i32, i32
  }
  func.func @transform_1(%arg0: i32) -> (i32, i32, i32) {
    %c0_i32 = arith.constant 0 : i32
    %c0_i32_0 = arith.constant 0 : i32
    %c0_i32_1 = arith.constant 0 : i32
    %c0_i32_2 = arith.constant 0 : i32
    return %c0_i32, %c0_i32_0, %c0_i32_1 : i32, i32, i32
  }
  func.func @transform_2(%arg0: i32) -> (i32, i32) {
    %c0_i32 = arith.constant 0 : i32
    %c0_i32_0 = arith.constant 0 : i32
    %c0_i32_1 = arith.constant 0 : i32
    return %c0_i32, %c0_i32_0 : i32, i32
  }
  func.func @transform_3(%arg0: i32) -> (i32, i32, i32) {
    %c0_i32 = arith.constant 0 : i32
    %c0_i32_0 = arith.constant 0 : i32
    %c0_i32_1 = arith.constant 0 : i32
    %c0_i32_2 = arith.constant 0 : i32
    return %c0_i32, %c0_i32_0, %c0_i32_1 : i32, i32, i32
  }
  func.func @transform_4(%arg0: i32) -> (i32, i32) {
    %c0_i32 = arith.constant 0 : i32
    %c0_i32_0 = arith.constant 0 : i32
    %c0_i32_1 = arith.constant 0 : i32
    return %c0_i32, %c0_i32_0 : i32, i32
  }
  func.func @transform_5(%arg0: i32) -> (i32, i32) {
    %c0_i32 = arith.constant 0 : i32
    %c0_i32_0 = arith.constant 0 : i32
    %c0_i32_1 = arith.constant 0 : i32
    return %c0_i32, %c0_i32_0 : i32, i32
  }
  func.func @transform_6(%arg0: i32) -> (i32, i32, i32) {
    %c0_i32 = arith.constant 0 : i32
    %c0_i32_0 = arith.constant 0 : i32
    %c0_i32_1 = arith.constant 0 : i32
    %c0_i32_2 = arith.constant 0 : i32
    return %c0_i32, %c0_i32_0, %c0_i32_1 : i32, i32, i32
  }
}

</mosaic_0001>

<llo_original>
// kernel: tpu_custom_call.1
$region0: #{tpu_custom_call.1}
  #allocation0 [shape = 'u32[]', space=smem, size = 0x4, offset = 0x4, fixed_abs, tag = 'smem constant byte address 0x4 - core index']
  #allocation1 [shape = 'u32[144,128]{1,0:T(1,128)}', space=vmem, size = 0x12000, scoped, tag = 'internal scratch']
  #allocation2 [shape = 'f32[2,18,64]{2,1,0:T(8,128)}', space=vmem, size = 0x6000, scoped, tag = 'scratch operand']
  #allocation3 [shape = 'f32[2,20,128]{2,1,0:T(8,128)}', space=vmem, size = 0x6000, scoped, tag = 'scratch operand']
  %s0 = inlined_call_operand.hbm [shape: f32[2,16,64], index: 0, kind: input, shape index: {}]
  %s1 = inlined_call_operand.hbm [shape: f32[3,64,128], index: 1, kind: input, shape index: {}]
  %s2 = inlined_call_operand.vmem [shape: f32[1,128], index: 2, kind: input, shape index: {}]
  %s3 = inlined_call_operand.hbm [shape: f32[5,128,128], index: 3, kind: input, shape index: {}]
  %s4 = inlined_call_operand.vmem [shape: f32[1,128], index: 4, kind: input, shape index: {}]
  %s5 = inlined_call_operand.hbm [shape: f32[64,128], index: 5, kind: input, shape index: {}]
  %s6 = inlined_call_operand.hbm [shape: f32[2,16,128], index: 6, kind: output, shape index: {}]
  %s7 = sld [smem:[#allocation0]]
  $region50: #{tpu_custom_call.1} parent=0
    _
  %s9 = ssub.s32 1, %s7
  %s10 = scalar_select 0, %s9, %s7
  $region1: #{tpu_custom_call.1} parent=0
    #allocation4 [shape = 'u8[16384]{0}', space=vmem, size = 0x4000, scoped, tag = 'input window, operand 0, single buffered']
    #allocation5 [shape = 's32[1]{0}', space=sflag, size = 0x4, scoped, tag = 'scoped memory for tpu_custom_call.1']
    #allocation6 [shape = 's32[1]{0}', space=sflag, size = 0x4, scoped, tag = 'scoped memory for tpu_custom_call.1']
    #allocation7 [shape = 'u8[98304]{0}', space=vmem, size = 0x18000, scoped, tag = 'input window, operand 1, single buffered']
    #allocation8 [shape = 's32[1]{0}', space=sflag, size = 0x4, scoped, tag = 'scoped memory for tpu_custom_call.1']
    #allocation9 [shape = 'u8[327680]{0}', space=vmem, size = 0x50000, scoped, tag = 'input window, operand 3, single buffered']
    #allocation10 [shape = 'u8[32768]{0}', space=vmem, size = 0x8000, scoped, tag = 'input window, operand 5, single buffered']
    #allocation11 [shape = 's32[1]{0}', space=sflag, size = 0x4, scoped, tag = 'scoped memory for tpu_custom_call.1']
    #allocation12 [shape = 'u8[16384]{0}', space=vmem, size = 0x4000, scoped, tag = 'output window, operand 0, single buffered']
    %11 = vsyncpa [#allocation5], 0
    %12 = vsyncpa [#allocation8], 0
    %13 = vsyncpa [#allocation11], 0
    %14 = vsyncpa [#allocation6], 0
    // Predicated region
    $region2: #{tpu_custom_call.1} parent=1 // pred_check
      _
    $region3: #{tpu_custom_call.1} parent=1 // pred_check_branch
      %16 = sbr.rel (0) target = $region5
    $region4: #{tpu_custom_call.1} parent=1 // pred_region
      %s18 = ssub.s32 512, 512
      %19 = vsyncadd [#allocation5], %s18
      %s20 = sshll.u32 [#allocation4], 4
      %s21 = int_to_ptr.vmem [resolvable:$true] %s20
      %26 = dma.hbm_to_vmem [thread:$0]  %s0, 512, %s21, [#allocation5], 128, 128, 8
    $region5: #{tpu_custom_call.1} parent=1 // pred_fallthru
      _
    // Predicated region
    $region6: #{tpu_custom_call.1} parent=1 // pred_check
      _
    $region7: #{tpu_custom_call.1} parent=1 // pred_check_branch
      %28 = sbr.rel (0) target = $region9
    $region8: #{tpu_custom_call.1} parent=1 // pred_region
      %s30 = ssub.s32 3072, 3072
      %31 = vsyncadd [#allocation8], %s30
      %s32 = sshll.u32 [#allocation7], 4
      %s33 = int_to_ptr.vmem [resolvable:$true] %s32
      %38 = dma.hbm_to_vmem [thread:$0]  %s1, 3072, %s33, [#allocation8], 128, 128, 8
    $region9: #{tpu_custom_call.1} parent=1 // pred_fallthru
      _
    // Predicated region
    $region10: #{tpu_custom_call.1} parent=1 // pred_check
      _
    $region11: #{tpu_custom_call.1} parent=1 // pred_check_branch
      %40 = sbr.rel (0) target = $region13
    $region12: #{tpu_custom_call.1} parent=1 // pred_region
      _
    $region13: #{tpu_custom_call.1} parent=1 // pred_fallthru
      _
    // Predicated region
    $region14: #{tpu_custom_call.1} parent=1 // pred_check
      _
    $region15: #{tpu_custom_call.1} parent=1 // pred_check_branch
      %42 = sbr.rel (0) target = $region17
    $region16: #{tpu_custom_call.1} parent=1 // pred_region
      %s44 = ssub.s32 10240, 10240
      %45 = vsyncadd [#allocation8], %s44
      %s46 = sshll.u32 [#allocation9], 4
      %s47 = int_to_ptr.vmem [resolvable:$true] %s46
      %52 = dma.hbm_to_vmem [thread:$0]  %s3, 10240, %s47, [#allocation8], 128, 128, 8
    $region17: #{tpu_custom_call.1} parent=1 // pred_fallthru
      _
    // Predicated region
    $region18: #{tpu_custom_call.1} parent=1 // pred_check
      _
    $region19: #{tpu_custom_call.1} parent=1 // pred_check_branch
      %54 = sbr.rel (0) target = $region21
    $region20: #{tpu_custom_call.1} parent=1 // pred_region
      _
    $region21: #{tpu_custom_call.1} parent=1 // pred_fallthru
      _
    // Predicated region
    $region22: #{tpu_custom_call.1} parent=1 // pred_check
      _
    $region23: #{tpu_custom_call.1} parent=1 // pred_check_branch
      %56 = sbr.rel (0) target = $region25
    $region24: #{tpu_custom_call.1} parent=1 // pred_region
      %s58 = ssub.s32 1024, 1024
      %59 = vsyncadd [#allocation11], %s58
      %s60 = sshll.u32 [#allocation10], 4
      %s61 = int_to_ptr.vmem [resolvable:$true] %s60
      %66 = dma.hbm_to_vmem [thread:$0]  %s5, 1024, %s61, [#allocation11], 128, 128, 8
    $region25: #{tpu_custom_call.1} parent=1 // pred_fallthru
      _
    // Predicated region
    $region26: #{tpu_custom_call.1} parent=1 // pred_check
      _
    $region27: #{tpu_custom_call.1} parent=1 // pred_check_branch
      %68 = sbr.rel (0) target = $region29
    $region28: #{tpu_custom_call.1} parent=1 // pred_region
      %69 = dma.done [#allocation5], 512
    $region29: #{tpu_custom_call.1} parent=1 // pred_fallthru
      _
    // Predicated region
    $region30: #{tpu_custom_call.1} parent=1 // pred_check
      _
    $region31: #{tpu_custom_call.1} parent=1 // pred_check_branch
      %71 = sbr.rel (0) target = $region33
    $region32: #{tpu_custom_call.1} parent=1 // pred_region
      %72 = dma.done [#allocation8], 3072
    $region33: #{tpu_custom_call.1} parent=1 // pred_fallthru
      _
    // Predicated region
    $region34: #{tpu_custom_call.1} parent=1 // pred_check
      _
    $region35: #{tpu_custom_call.1} parent=1 // pred_check_branch
      %74 = sbr.rel (0) target = $region37
    $region36: #{tpu_custom_call.1} parent=1 // pred_region
      %75 = dma.done [#allocation8], 10240
    $region37: #{tpu_custom_call.1} parent=1 // pred_fallthru
      _
    // Predicated region
    $region38: #{tpu_custom_call.1} parent=1 // pred_check
      _
    $region39: #{tpu_custom_call.1} parent=1 // pred_check_branch
      %77 = sbr.rel (0) target = $region41
    $region40: #{tpu_custom_call.1} parent=1 // pred_region
      %78 = dma.done [#allocation11], 1024
    $region41: #{tpu_custom_call.1} parent=1 // pred_fallthru
      _
    %vm79 = vcmask 516096
    %80 = vst.msk [vmem:[#allocation2] sm:$0x1] %vm79, 0.0
    %81 = vst.msk [vmem:[#allocation2 + $0x18] sm:$0x1] %vm79, 0.0
    %82 = vst.msk [vmem:[#allocation2 + $0x11] sm:$0x1] %vm79, 0.0
    %83 = vst.msk [vmem:[#allocation2 + $0x29] sm:$0x1] %vm79, 0.0
    %v84 = vld [vmem:[#allocation4] sm:$0xff]
    %v85 = vld [vmem:[#allocation4 + $0x8] sm:$0xff]
    %v86 = vld [vmem:[#allocation4 + $0x10] sm:$0xff]
    %v87 = vld [vmem:[#allocation4 + $0x18] sm:$0xff]
    %vm88 = vcmask 523264
    %89 = vst.msk [vmem:[#allocation2 + $0x1] sm:$0xff] %vm88, %v84
    %90 = vst.msk [vmem:[#allocation2 + $0x9] sm:$0xff] %vm88, %v85
    %91 = vst.msk [vmem:[#allocation2 + $0x19] sm:$0xff] %vm88, %v86
    %92 = vst.msk [vmem:[#allocation2 + $0x21] sm:$0xff] %vm88, %v87
    %v93 = vld [vmem:[#allocation2] sm:$0xff]
    %v94 = vld [vmem:[#allocation2 + $0x8] sm:$0xff]
    %v95 = vld [vmem:[#allocation2 + $0x18] sm:$0xff]
    %v96 = vld [vmem:[#allocation2 + $0x20] sm:$0xff]
    %v97 = vld [vmem:[#allocation7] sm:$0xff]
    %v98 = vld [vmem:[#allocation7 + $0x8] sm:$0xff]
    %v99 = vld [vmem:[#allocation7 + $0x10] sm:$0xff]
    %v100 = vld [vmem:[#allocation7 + $0x18] sm:$0xff]
    %v101 = vld [vmem:[#allocation7 + $0x20] sm:$0xff]
    %v102 = vld [vmem:[#allocation7 + $0x28] sm:$0xff]
    %v103 = vld [vmem:[#allocation7 + $0x30] sm:$0xff]
    %v104 = vld [vmem:[#allocation7 + $0x38] sm:$0xff]
    %v105 = vld [vmem:[#allocation2 + $0x1] sm:$0xff]
    %v106 = vld [vmem:[#allocation2 + $0x9] sm:$0xff]
    %v107 = vld [vmem:[#allocation2 + $0x19] sm:$0xff]
    %v108 = vld [vmem:[#allocation2 + $0x21] sm:$0xff]
    %s109 = scalar_lea.vmem [#allocation7], 64
    %v110 = vld [vmem:[%s109] sm:$0xff]
    %v111 = vld [vmem:[%s109 + $0x8] sm:$0xff]
    %v112 = vld [vmem:[%s109 + $0x10] sm:$0xff]
    %v113 = vld [vmem:[%s109 + $0x18] sm:$0xff]
    %v114 = vld [vmem:[%s109 + $0x20] sm:$0xff]
    %v115 = vld [vmem:[%s109 + $0x28] sm:$0xff]
    %v116 = vld [vmem:[%s109 + $0x30] sm:$0xff]
    %v117 = vld [vmem:[%s109 + $0x38] sm:$0xff]
    %v119 = vsel %vm88, %v105, 0
    %v122 = vsel %vm88, %v106, 0
    %v125 = vsel %vm88, %v107, 0
    %v128 = vsel %vm88, %v108, 0
    %130 = vmatprep.subr.mxu0 0.0
    %131 = vmatpush1.msra.mxu0 %v110
    %132 = vmatprep.subr.mxu0 0.0
    %133 = vmatpush1.msra.mxu0 %v111
    %134 = vmatprep.subr.mxu0 0.0
    %135 = vmatpush1.msra.mxu0 %v112
    %136 = vmatprep.subr.mxu0 0.0
    %137 = vmatpush1.msra.mxu0 %v113
    %138 = vmatprep.subr.mxu0 0.0
    %139 = vmatpush1.msra.mxu0 %v114
    %140 = vmatprep.subr.mxu0 0.0
    %141 = vmatpush1.msra.mxu0 %v115
    %142 = vmatprep.subr.mxu0 0.0
    %143 = vmatpush1.msra.mxu0 %v116
    %144 = vmatprep.subr.mxu0 0.0
    %145 = vmatpush1.msra.mxu0 %v117
    %146 = vmatprep.subr.mxu0 0.0
    %147 = vmatpush1.msra.mxu0 0.0
    %148 = vmatprep.subr.mxu0 0.0
    %149 = vmatpush1.msra.mxu0 0.0
    %150 = vmatprep.subr.mxu0 0.0
    %151 = vmatpush1.msra.mxu0 0.0
    %152 = vmatprep.subr.mxu0 0.0
    %153 = vmatpush1.msra.mxu0 0.0
    %154 = vmatprep.subr.mxu0 0.0
    %155 = vmatpush1.msra.mxu0 0.0
    %156 = vmatprep.subr.mxu0 0.0
    %157 = vmatpush1.msra.mxu0 0.0
    %158 = vmatprep.subr.mxu0 0.0
    %159 = vmatpush1.msra.mxu0 0.0
    %160 = vmatprep.subr.mxu0 0.0
    %161 = vmatpush1.msra.mxu0 0.0
    %162 = vmatprep.subr.mxu0 0.0
    %163 = vmatpush1.msra.mxu0 0.0
    %164 = vmatprep.subr.mxu0 0.0
    %165 = vmatpush1.msra.mxu0 0.0
    %166 = vmatprep.subr.mxu0 0.0
    %167 = vmatpush1.msra.mxu0 0.0
    %168 = vmatprep.subr.mxu0 0.0
    %169 = vmatpush1.msra.mxu0 0.0
    %170 = vmatprep.subr.mxu0 0.0
    %171 = vmatpush1.msra.mxu0 0.0
    %172 = vmatprep.subr.mxu0 0.0
    %173 = vmatpush1.msra.mxu0 0.0
    %174 = vmatprep.subr.mxu0 0.0
    %175 = vmatpush1.msra.mxu0 0.0
    %176 = vmatprep.subr.mxu0 0.0
    %177 = vmatpush1.msra.mxu0 0.0
    %178 = vmatprep.subr.mxu0 0.0
    %179 = vmatpush1.msra.mxu0 0.0
    %180 = vmatprep.subr.mxu0 0.0
    %181 = vmatpush1.msra.mxu0 0.0
    %182 = vmatprep.subr.mxu0 0.0
    %183 = vmatpush1.msra.mxu0 0.0
    %184 = vmatprep.subr.mxu0 0.0
    %185 = vmatpush1.msra.mxu0 0.0
    %186 = vmatprep.subr.mxu0 0.0
    %187 = vmatpush1.msra.mxu0 0.0
    %188 = vmatprep.subr.mxu0 0.0
    %189 = vmatpush1.msra.mxu0 0.0
    %190 = vmatprep.subr.mxu0 0.0
    %191 = vmatpush1.msra.mxu0 0.0
    %192 = vmatprep.subr.mxu0 0.0
    %193 = vmatpush1.msra.mxu0 0.0
    %194 = vmatprep.mubr.f32.mxu0 0.0
    %195 = vmatmul.mubr.f32.gmra.mrb[0].mxu0 %v119
    %v196 = vpop.f32.mrb[0].mxu0
    %v197 = vadd.f32 0.0, %v196
    %v198 = vpop.f32.mrb[0].mxu0
    %199 = vmatprep.mubr.f32.mxu0 0.0
    %200 = vmatmul.mubr.f32.gmra.mrb[0].mxu0 %v122
    %v201 = vpop.f32.mrb[0].mxu0
    %v202 = vadd.f32 0.0, %v201
    %v203 = vpop.f32.mrb[0].mxu0
    %204 = vmatprep.mubr.f32.mxu0 0.0
    %205 = vmatmul.mubr.f32.gmra.mrb[0].mxu0 %v125
    %v206 = vpop.f32.mrb[0].mxu0
    %v207 = vadd.f32 0.0, %v206
    %v208 = vpop.f32.mrb[0].mxu0
    %209 = vmatprep.mubr.f32.mxu0 0.0
    %210 = vmatmul.mubr.f32.gmra.mrb[0].mxu0 %v128
    %v211 = vpop.f32.mrb[0].mxu0
    %v212 = vadd.f32 0.0, %v211
    %v213 = vpop.f32.mrb[0].mxu0
    %214 = vdwg.mxu0
    %v216 = vsel %vm88, %v93, 0
    %v219 = vsel %vm88, %v94, 0
    %v222 = vsel %vm88, %v95, 0
    %v225 = vsel %vm88, %v96, 0
    %227 = vmatprep.subr.mxu0 0.0
    %228 = vmatpush1.msra.mxu0 %v97
    %229 = vmatprep.subr.mxu0 0.0
    %230 = vmatpush1.msra.mxu0 %v98
    %231 = vmatprep.subr.mxu0 0.0
    %232 = vmatpush1.msra.mxu0 %v99
    %233 = vmatprep.subr.mxu0 0.0
    %234 = vmatpush1.msra.mxu0 %v100
    %235 = vmatprep.subr.mxu0 0.0
    %236 = vmatpush1.msra.mxu0 %v101
    %237 = vmatprep.subr.mxu0 0.0
    %238 = vmatpush1.msra.mxu0 %v102
    %239 = vmatprep.subr.mxu0 0.0
    %240 = vmatpush1.msra.mxu0 %v103
    %241 = vmatprep.subr.mxu0 0.0
    %242 = vmatpush1.msra.mxu0 %v104
    %243 = vmatprep.subr.mxu0 0.0
    %244 = vmatpush1.msra.mxu0 0.0
    %245 = vmatprep.subr.mxu0 0.0
    %246 = vmatpush1.msra.mxu0 0.0
    %247 = vmatprep.subr.mxu0 0.0
    %248 = vmatpush1.msra.mxu0 0.0
    %249 = vmatprep.subr.mxu0 0.0
    %250 = vmatpush1.msra.mxu0 0.0
    %251 = vmatprep.subr.mxu0 0.0
    %252 = vmatpush1.msra.mxu0 0.0
    %253 = vmatprep.subr.mxu0 0.0
    %254 = vmatpush1.msra.mxu0 0.0
    %255 = vmatprep.subr.mxu0 0.0
    %256 = vmatpush1.msra.mxu0 0.0
    %257 = vmatprep.subr.mxu0 0.0
    %258 = vmatpush1.msra.mxu0 0.0
    %259 = vmatprep.subr.mxu0 0.0
    %260 = vmatpush1.msra.mxu0 0.0
    %261 = vmatprep.subr.mxu0 0.0
    %262 = vmatpush1.msra.mxu0 0.0
    %263 = vmatprep.subr.mxu0 0.0
    %264 = vmatpush1.msra.mxu0 0.0
    %265 = vmatprep.subr.mxu0 0.0
    %266 = vmatpush1.msra.mxu0 0.0
    %267 = vmatprep.subr.mxu0 0.0
    %268 = vmatpush1.msra.mxu0 0.0
    %269 = vmatprep.subr.mxu0 0.0
    %270 = vmatpush1.msra.mxu0 0.0
    %271 = vmatprep.subr.mxu0 0.0
    %272 = vmatpush1.msra.mxu0 0.0
    %273 = vmatprep.subr.mxu0 0.0
    %274 = vmatpush1.msra.mxu0 0.0
    %275 = vmatprep.subr.mxu0 0.0
    %276 = vmatpush1.msra.mxu0 0.0
    %277 = vmatprep.subr.mxu0 0.0
    %278 = vmatpush1.msra.mxu0 0.0
    %279 = vmatprep.subr.mxu0 0.0
    %280 = vmatpush1.msra.mxu0 0.0
    %281 = vmatprep.subr.mxu0 0.0
    %282 = vmatpush1.msra.mxu0 0.0
    %283 = vmatprep.subr.mxu0 0.0
    %284 = vmatpush1.msra.mxu0 0.0
    %285 = vmatprep.subr.mxu0 0.0
    %286 = vmatpush1.msra.mxu0 0.0
    %287 = vmatprep.subr.mxu0 0.0
    %288 = vmatpush1.msra.mxu0 0.0
    %289 = vmatprep.subr.mxu0 0.0
    %290 = vmatpush1.msra.mxu0 0.0
    %291 = vmatprep.mubr.f32.mxu0 0.0
    %292 = vmatmul.mubr.f32.gmra.mrb[0].mxu0 %v216
    %v293 = vpop.f32.mrb[0].mxu0
    %v294 = vadd.f32 %v197, %v293
    %v295 = vpop.f32.mrb[0].mxu0
    %296 = vmatprep.mubr.f32.mxu0 0.0
    %297 = vmatmul.mubr.f32.gmra.mrb[0].mxu0 %v219
    %v298 = vpop.f32.mrb[0].mxu0
    %v299 = vadd.f32 %v202, %v298
    %v300 = vpop.f32.mrb[0].mxu0
    %301 = vmatprep.mubr.f32.mxu0 0.0
    %302 = vmatmul.mubr.f32.gmra.mrb[0].mxu0 %v222
    %v303 = vpop.f32.mrb[0].mxu0
    %v304 = vadd.f32 %v207, %v303
    %v305 = vpop.f32.mrb[0].mxu0
    %306 = vmatprep.mubr.f32.mxu0 0.0
    %307 = vmatmul.mubr.f32.gmra.mrb[0].mxu0 %v225
    %v308 = vpop.f32.mrb[0].mxu0
    %v309 = vadd.f32 %v212, %v308
    %v310 = vpop.f32.mrb[0].mxu0
    %311 = vdwg.mxu0
    %v312 = vld [vmem:[#allocation2 + $0x2] sm:$0xff]
    %v313 = vld [vmem:[#allocation2 + $0xa] sm:$0xff]
    %v314 = vld [vmem:[#allocation2 + $0x1a] sm:$0xff]
    %v315 = vld [vmem:[#allocation2 + $0x22] sm:$0xff]
    %s316 = scalar_lea.vmem [#allocation7], 128
    %v317 = vld [vmem:[%s316] sm:$0xff]
    %v318 = vld [vmem:[%s316 + $0x8] sm:$0xff]
    %v319 = vld [vmem:[%s316 + $0x10] sm:$0xff]
    %v320 = vld [vmem:[%s316 + $0x18] sm:$0xff]
    %v321 = vld [vmem:[%s316 + $0x20] sm:$0xff]
    %v322 = vld [vmem:[%s316 + $0x28] sm:$0xff]
    %v323 = vld [vmem:[%s316 + $0x30] sm:$0xff]
    %v324 = vld [vmem:[%s316 + $0x38] sm:$0xff]
    %v326 = vsel %vm88, %v312, 0
    %v329 = vsel %vm88, %v313, 0
    %v332 = vsel %vm88, %v314, 0
    %v335 = vsel %vm88, %v315, 0
    %337 = vmatprep.subr.mxu0 0.0
    %338 = vmatpush1.msra.mxu0 %v317
    %339 = vmatprep.subr.mxu0 0.0
    %340 = vmatpush1.msra.mxu0 %v318
    %341 = vmatprep.subr.mxu0 0.0
    %342 = vmatpush1.msra.mxu0 %v319
    %343 = vmatprep.subr.mxu0 0.0
    %344 = vmatpush1.msra.mxu0 %v320
    %345 = vmatprep.subr.mxu0 0.0
    %346 = vmatpush1.msra.mxu0 %v321
    %347 = vmatprep.subr.mxu0 0.0
    %348 = vmatpush1.msra.mxu0 %v322
    %349 = vmatprep.subr.mxu0 0.0
    %350 = vmatpush1.msra.mxu0 %v323
    %351 = vmatprep.subr.mxu0 0.0
    %352 = vmatpush1.msra.mxu0 %v324
    %353 = vmatprep.subr.mxu0 0.0
    %354 = vmatpush1.msra.mxu0 0.0
    %355 = vmatprep.subr.mxu0 0.0
    %356 = vmatpush1.msra.mxu0 0.0
    %357 = vmatprep.subr.mxu0 0.0
    %358 = vmatpush1.msra.mxu0 0.0
    %359 = vmatprep.subr.mxu0 0.0
    %360 = vmatpush1.msra.mxu0 0.0
    %361 = vmatprep.subr.mxu0 0.0
    %362 = vmatpush1.msra.mxu0 0.0
    %363 = vmatprep.subr.mxu0 0.0
    %364 = vmatpush1.msra.mxu0 0.0
    %365 = vmatprep.subr.mxu0 0.0
    %366 = vmatpush1.msra.mxu0 0.0
    %367 = vmatprep.subr.mxu0 0.0
    %368 = vmatpush1.msra.mxu0 0.0
    %369 = vmatprep.subr.mxu0 0.0
    %370 = vmatpush1.msra.mxu0 0.0
    %371 = vmatprep.subr.mxu0 0.0
    %372 = vmatpush1.msra.mxu0 0.0
    %373 = vmatprep.subr.mxu0 0.0
    %374 = vmatpush1.msra.mxu0 0.0
    %375 = vmatprep.subr.mxu0 0.0
    %376 = vmatpush1.msra.mxu0 0.0
    %377 = vmatprep.subr.mxu0 0.0
    %378 = vmatpush1.msra.mxu0 0.0
    %379 = vmatprep.subr.mxu0 0.0
    %380 = vmatpush1.msra.mxu0 0.0
    %381 = vmatprep.subr.mxu0 0.0
    %382 = vmatpush1.msra.mxu0 0.0
    %383 = vmatprep.subr.mxu0 0.0
    %384 = vmatpush1.msra.mxu0 0.0
    %385 = vmatprep.subr.mxu0 0.0
    %386 = vmatpush1.msra.mxu0 0.0
    %387 = vmatprep.subr.mxu0 0.0
    %388 = vmatpush1.msra.mxu0 0.0
    %389 = vmatprep.subr.mxu0 0.0
    %390 = vmatpush1.msra.mxu0 0.0
    %391 = vmatprep.subr.mxu0 0.0
    %392 = vmatpush1.msra.mxu0 0.0
    %393 = vmatprep.subr.mxu0 0.0
    %394 = vmatpush1.msra.mxu0 0.0
    %395 = vmatprep.subr.mxu0 0.0
    %396 = vmatpush1.msra.mxu0 0.0
    %397 = vmatprep.subr.mxu0 0.0
    %398 = vmatpush1.msra.mxu0 0.0
    %399 = vmatprep.subr.mxu0 0.0
    %400 = vmatpush1.msra.mxu0 0.0
    %401 = vmatprep.mubr.f32.mxu0 0.0
    %402 = vmatmul.mubr.f32.gmra.mrb[0].mxu0 %v326
    %v403 = vpop.f32.mrb[0].mxu0
    %v404 = vadd.f32 0.0, %v403
    %v405 = vpop.f32.mrb[0].mxu0
    %406 = vmatprep.mubr.f32.mxu0 0.0
    %407 = vmatmul.mubr.f32.gmra.mrb[0].mxu0 %v329
    %v408 = vpop.f32.mrb[0].mxu0
    %v409 = vadd.f32 0.0, %v408
    %v410 = vpop.f32.mrb[0].mxu0
    %411 = vmatprep.mubr.f32.mxu0 0.0
    %412 = vmatmul.mubr.f32.gmra.mrb[0].mxu0 %v332
    %v413 = vpop.f32.mrb[0].mxu0
    %v414 = vadd.f32 0.0, %v413
    %v415 = vpop.f32.mrb[0].mxu0
    %416 = vmatprep.mubr.f32.mxu0 0.0
    %417 = vmatmul.mubr.f32.gmra.mrb[0].mxu0 %v335
    %v418 = vpop.f32.mrb[0].mxu0
    %v419 = vadd.f32 0.0, %v418
    %v420 = vpop.f32.mrb[0].mxu0
    %421 = vdwg.mxu0
    %v422 = vadd.f32 %v294, %v404
    %v423 = vadd.f32 %v299, %v409
    %v424 = vadd.f32 %v304, %v414
    %v425 = vadd.f32 %v309, %v419
    %v426 = vld [vmem:[%s2] sm:$0x1]
    %v428 = vlaneseq
    %v429 = vshrl.u32 %v428, 7
    %v430 = vsub.s32 0, %v429
    %v431 = vrot.slane %v426, %v430
    %v433 = vadd.f32 %v422, %v431
    %v434 = vadd.f32 %v423, %v431
    %v435 = vadd.f32 %v424, %v431
    %v436 = vadd.f32 %v425, %v431
    %v437 = vmax.f32 %v433, 0.0
    %v438 = vmax.f32 %v434, 0.0
    %v439 = vmax.f32 %v435, 0.0
    %v440 = vmax.f32 %v436, 0.0
    %441 = vst [vmem:[#allocation3] sm:$0x3] 0.0
    %442 = vst [vmem:[#allocation3 + $0x18] sm:$0x3] 0.0
    %443 = vst [vmem:[#allocation3 + $0x12] sm:$0x3] 0.0
    %444 = vst [vmem:[#allocation3 + $0x2a] sm:$0x3] 0.0
    %445 = vst [vmem:[#allocation3 + $0x2] sm:$0xff] %v437
    %446 = vst [vmem:[#allocation3 + $0xa] sm:$0xff] %v438
    %447 = vst [vmem:[#allocation3 + $0x1a] sm:$0xff] %v439
    %448 = vst [vmem:[#allocation3 + $0x22] sm:$0xff] %v440
    %v449 = vld [vmem:[#allocation3] sm:$0xff]
    %v450 = vld [vmem:[#allocation3 + $0x8] sm:$0xff]
    %v451 = vld [vmem:[#allocation3 + $0x18] sm:$0xff]
    %v452 = vld [vmem:[#allocation3 + $0x20] sm:$0xff]
    %v453 = vld [vmem:[#allocation9] sm:$0xff]
    %v454 = vld [vmem:[#allocation9 + $0x8] sm:$0xff]
    %v455 = vld [vmem:[#allocation9 + $0x10] sm:$0xff]
    %v456 = vld [vmem:[#allocation9 + $0x18] sm:$0xff]
    %v457 = vld [vmem:[#allocation9 + $0x20] sm:$0xff]
    %v458 = vld [vmem:[#allocation9 + $0x28] sm:$0xff]
    %v459 = vld [vmem:[#allocation9 + $0x30] sm:$0xff]
    %v460 = vld [vmem:[#allocation9 + $0x38] sm:$0xff]
    %v461 = vld [vmem:[#allocation9 + $0x40] sm:$0xff]
    %v462 = vld [vmem:[#allocation9 + $0x48] sm:$0xff]
    %v463 = vld [vmem:[#allocation9 + $0x50] sm:$0xff]
    %v464 = vld [vmem:[#allocation9 + $0x58] sm:$0xff]
    %v465 = vld [vmem:[#allocation9 + $0x60] sm:$0xff]
    %v466 = vld [vmem:[#allocation9 + $0x68] sm:$0xff]
    %v467 = vld [vmem:[#allocation9 + $0x70] sm:$0xff]
    %v468 = vld [vmem:[#allocation9 + $0x78] sm:$0xff]
    %v469 = vld [vmem:[#allocation3 + $0x1] sm:$0xff]
    %v470 = vld [vmem:[#allocation3 + $0x9] sm:$0xff]
    %v471 = vld [vmem:[#allocation3 + $0x19] sm:$0xff]
    %v472 = vld [vmem:[#allocation3 + $0x21] sm:$0xff]
    %s473 = scalar_lea.vmem [#allocation9], 128
    %v474 = vld [vmem:[%s473] sm:$0xff]
    %v475 = vld [vmem:[%s473 + $0x8] sm:$0xff]
    %v476 = vld [vmem:[%s473 + $0x10] sm:$0xff]
    %v477 = vld [vmem:[%s473 + $0x18] sm:$0xff]
    %v478 = vld [vmem:[%s473 + $0x20] sm:$0xff]
    %v479 = vld [vmem:[%s473 + $0x28] sm:$0xff]
    %v480 = vld [vmem:[%s473 + $0x30] sm:$0xff]
    %v481 = vld [vmem:[%s473 + $0x38] sm:$0xff]
    %v482 = vld [vmem:[%s473 + $0x40] sm:$0xff]
    %v483 = vld [vmem:[%s473 + $0x48] sm:$0xff]
    %v484 = vld [vmem:[%s473 + $0x50] sm:$0xff]
    %v485 = vld [vmem:[%s473 + $0x58] sm:$0xff]
    %v486 = vld [vmem:[%s473 + $0x60] sm:$0xff]
    %v487 = vld [vmem:[%s473 + $0x68] sm:$0xff]
    %v488 = vld [vmem:[%s473 + $0x70] sm:$0xff]
    %v489 = vld [vmem:[%s473 + $0x78] sm:$0xff]
    %490 = vmatprep.subr.mxu0 0.0
    %491 = vmatpush1.msra.mxu0 %v474
    %492 = vmatprep.subr.mxu0 0.0
    %493 = vmatpush1.msra.mxu0 %v475
    %494 = vmatprep.subr.mxu0 0.0
    %495 = vmatpush1.msra.mxu0 %v476
    %496 = vmatprep.subr.mxu0 0.0
    %497 = vmatpush1.msra.mxu0 %v477
    %498 = vmatprep.subr.mxu0 0.0
    %499 = vmatpush1.msra.mxu0 %v478
    %500 = vmatprep.subr.mxu0 0.0
    %501 = vmatpush1.msra.mxu0 %v479
    %502 = vmatprep.subr.mxu0 0.0
    %503 = vmatpush1.msra.mxu0 %v480
    %504 = vmatprep.subr.mxu0 0.0
    %505 = vmatpush1.msra.mxu0 %v481
    %506 = vmatprep.subr.mxu0 0.0
    %507 = vmatpush1.msra.mxu0 %v482
    %508 = vmatprep.subr.mxu0 0.0
    %509 = vmatpush1.msra.mxu0 %v483
    %510 = vmatprep.subr.mxu0 0.0
    %511 = vmatpush1.msra.mxu0 %v484
    %512 = vmatprep.subr.mxu0 0.0
    %513 = vmatpush1.msra.mxu0 %v485
    %514 = vmatprep.subr.mxu0 0.0
    %515 = vmatpush1.msra.mxu0 %v486
    %516 = vmatprep.subr.mxu0 0.0
    %517 = vmatpush1.msra.mxu0 %v487
    %518 = vmatprep.subr.mxu0 0.0
    %519 = vmatpush1.msra.mxu0 %v488
    %520 = vmatprep.subr.mxu0 0.0
    %521 = vmatpush1.msra.mxu0 %v489
    %522 = vmatprep.subr.mxu0 0.0
    %523 = vmatpush1.msra.mxu0 0.0
    %524 = vmatprep.subr.mxu0 0.0
    %525 = vmatpush1.msra.mxu0 0.0
    %526 = vmatprep.subr.mxu0 0.0
    %527 = vmatpush1.msra.mxu0 0.0
    %528 = vmatprep.subr.mxu0 0.0
    %529 = vmatpush1.msra.mxu0 0.0
    %530 = vmatprep.subr.mxu0 0.0
    %531 = vmatpush1.msra.mxu0 0.0
    %532 = vmatprep.subr.mxu0 0.0
    %533 = vmatpush1.msra.mxu0 0.0
    %534 = vmatprep.subr.mxu0 0.0
    %535 = vmatpush1.msra.mxu0 0.0
    %536 = vmatprep.subr.mxu0 0.0
    %537 = vmatpush1.msra.mxu0 0.0
    %538 = vmatprep.subr.mxu0 0.0
    %539 = vmatpush1.msra.mxu0 0.0
    %540 = vmatprep.subr.mxu0 0.0
    %541 = vmatpush1.msra.mxu0 0.0
    %542 = vmatprep.subr.mxu0 0.0
    %543 = vmatpush1.msra.mxu0 0.0
    %544 = vmatprep.subr.mxu0 0.0
    %545 = vmatpush1.msra.mxu0 0.0
    %546 = vmatprep.subr.mxu0 0.0
    %547 = vmatpush1.msra.mxu0 0.0
    %548 = vmatprep.subr.mxu0 0.0
    %549 = vmatpush1.msra.mxu0 0.0
    %550 = vmatprep.subr.mxu0 0.0
    %551 = vmatpush1.msra.mxu0 0.0
    %552 = vmatprep.subr.mxu0 0.0
    %553 = vmatpush1.msra.mxu0 0.0
    %554 = vmatprep.mubr.f32.mxu0 0.0
    %555 = vmatmul.mubr.f32.gmra.mrb[0].mxu0 %v469
    %v556 = vpop.f32.mrb[0].mxu0
    %v557 = vadd.f32 0.0, %v556
    %v558 = vpop.f32.mrb[0].mxu0
    %559 = vmatprep.mubr.f32.mxu0 0.0
    %560 = vmatmul.mubr.f32.gmra.mrb[0].mxu0 %v470
    %v561 = vpop.f32.mrb[0].mxu0
    %v562 = vadd.f32 0.0, %v561
    %v563 = vpop.f32.mrb[0].mxu0
    %564 = vmatprep.mubr.f32.mxu0 0.0
    %565 = vmatmul.mubr.f32.gmra.mrb[0].mxu0 %v471
    %v566 = vpop.f32.mrb[0].mxu0
    %v567 = vadd.f32 0.0, %v566
    %v568 = vpop.f32.mrb[0].mxu0
    %569 = vmatprep.mubr.f32.mxu0 0.0
    %570 = vmatmul.mubr.f32.gmra.mrb[0].mxu0 %v472
    %v571 = vpop.f32.mrb[0].mxu0
    %v572 = vadd.f32 0.0, %v571
    %v573 = vpop.f32.mrb[0].mxu0
    %574 = vdwg.mxu0
    %575 = vmatprep.subr.mxu0 0.0
    %576 = vmatpush1.msra.mxu0 %v453
    %577 = vmatprep.subr.mxu0 0.0
    %578 = vmatpush1.msra.mxu0 %v454
    %579 = vmatprep.subr.mxu0 0.0
    %580 = vmatpush1.msra.mxu0 %v455
    %581 = vmatprep.subr.mxu0 0.0
    %582 = vmatpush1.msra.mxu0 %v456
    %583 = vmatprep.subr.mxu0 0.0
    %584 = vmatpush1.msra.mxu0 %v457
    %585 = vmatprep.subr.mxu0 0.0
    %586 = vmatpush1.msra.mxu0 %v458
    %587 = vmatprep.subr.mxu0 0.0
    %588 = vmatpush1.msra.mxu0 %v459
    %589 = vmatprep.subr.mxu0 0.0
    %590 = vmatpush1.msra.mxu0 %v460
    %591 = vmatprep.subr.mxu0 0.0
    %592 = vmatpush1.msra.mxu0 %v461
    %593 = vmatprep.subr.mxu0 0.0
    %594 = vmatpush1.msra.mxu0 %v462
    %595 = vmatprep.subr.mxu0 0.0
    %596 = vmatpush1.msra.mxu0 %v463
    %597 = vmatprep.subr.mxu0 0.0
    %598 = vmatpush1.msra.mxu0 %v464
    %599 = vmatprep.subr.mxu0 0.0
    %600 = vmatpush1.msra.mxu0 %v465
    %601 = vmatprep.subr.mxu0 0.0
    %602 = vmatpush1.msra.mxu0 %v466
    %603 = vmatprep.subr.mxu0 0.0
    %604 = vmatpush1.msra.mxu0 %v467
    %605 = vmatprep.subr.mxu0 0.0
    %606 = vmatpush1.msra.mxu0 %v468
    %607 = vmatprep.subr.mxu0 0.0
    %608 = vmatpush1.msra.mxu0 0.0
    %609 = vmatprep.subr.mxu0 0.0
    %610 = vmatpush1.msra.mxu0 0.0
    %611 = vmatprep.subr.mxu0 0.0
    %612 = vmatpush1.msra.mxu0 0.0
    %613 = vmatprep.subr.mxu0 0.0
    %614 = vmatpush1.msra.mxu0 0.0
    %615 = vmatprep.subr.mxu0 0.0
    %616 = vmatpush1.msra.mxu0 0.0
    %617 = vmatprep.subr.mxu0 0.0
    %618 = vmatpush1.msra.mxu0 0.0
    %619 = vmatprep.subr.mxu0 0.0
    %620 = vmatpush1.msra.mxu0 0.0
    %621 = vmatprep.subr.mxu0 0.0
    %622 = vmatpush1.msra.mxu0 0.0
    %623 = vmatprep.subr.mxu0 0.0
    %624 = vmatpush1.msra.mxu0 0.0
    %625 = vmatprep.subr.mxu0 0.0
    %626 = vmatpush1.msra.mxu0 0.0
    %627 = vmatprep.subr.mxu0 0.0
    %628 = vmatpush1.msra.mxu0 0.0
    %629 = vmatprep.subr.mxu0 0.0
    %630 = vmatpush1.msra.mxu0 0.0
    %631 = vmatprep.subr.mxu0 0.0
    %632 = vmatpush1.msra.mxu0 0.0
    %633 = vmatprep.subr.mxu0 0.0
    %634 = vmatpush1.msra.mxu0 0.0
    %635 = vmatprep.subr.mxu0 0.0
    %636 = vmatpush1.msra.mxu0 0.0
    %637 = vmatprep.subr.mxu0 0.0
    %638 = vmatpush1.msra.mxu0 0.0
    %639 = vmatprep.mubr.f32.mxu0 0.0
    %640 = vmatmul.mubr.f32.gmra.mrb[0].mxu0 %v449
    %v641 = vpop.f32.mrb[0].mxu0
    %v642 = vadd.f32 %v557, %v641
    %v643 = vpop.f32.mrb[0].mxu0
    %644 = vmatprep.mubr.f32.mxu0 0.0
    %645 = vmatmul.mubr.f32.gmra.mrb[0].mxu0 %v450
    %v646 = vpop.f32.mrb[0].mxu0
    %v647 = vadd.f32 %v562, %v646
    %v648 = vpop.f32.mrb[0].mxu0
    %649 = vmatprep.mubr.f32.mxu0 0.0
    %650 = vmatmul.mubr.f32.gmra.mrb[0].mxu0 %v451
    %v651 = vpop.f32.mrb[0].mxu0
    %v652 = vadd.f32 %v567, %v651
    %v653 = vpop.f32.mrb[0].mxu0
    %654 = vmatprep.mubr.f32.mxu0 0.0
    %655 = vmatmul.mubr.f32.gmra.mrb[0].mxu0 %v452
    %v656 = vpop.f32.mrb[0].mxu0
    %v657 = vadd.f32 %v572, %v656
    %v658 = vpop.f32.mrb[0].mxu0
    %659 = vdwg.mxu0
    %v660 = vld [vmem:[#allocation3 + $0x2] sm:$0xff]
    %v661 = vld [vmem:[#allocation3 + $0xa] sm:$0xff]
    %v662 = vld [vmem:[#allocation3 + $0x1a] sm:$0xff]
    %v663 = vld [vmem:[#allocation3 + $0x22] sm:$0xff]
    %s664 = scalar_lea.vmem [#allocation9], 256
    %v665 = vld [vmem:[%s664] sm:$0xff]
    %v666 = vld [vmem:[%s664 + $0x8] sm:$0xff]
    %v667 = vld [vmem:[%s664 + $0x10] sm:$0xff]
    %v668 = vld [vmem:[%s664 + $0x18] sm:$0xff]
    %v669 = vld [vmem:[%s664 + $0x20] sm:$0xff]
    %v670 = vld [vmem:[%s664 + $0x28] sm:$0xff]
    %v671 = vld [vmem:[%s664 + $0x30] sm:$0xff]
    %v672 = vld [vmem:[%s664 + $0x38] sm:$0xff]
    %v673 = vld [vmem:[%s664 + $0x40] sm:$0xff]
    %v674 = vld [vmem:[%s664 + $0x48] sm:$0xff]
    %v675 = vld [vmem:[%s664 + $0x50] sm:$0xff]
    %v676 = vld [vmem:[%s664 + $0x58] sm:$0xff]
    %v677 = vld [vmem:[%s664 + $0x60] sm:$0xff]
    %v678 = vld [vmem:[%s664 + $0x68] sm:$0xff]
    %v679 = vld [vmem:[%s664 + $0x70] sm:$0xff]
    %v680 = vld [vmem:[%s664 + $0x78] sm:$0xff]
    %681 = vmatprep.subr.mxu0 0.0
    %682 = vmatpush1.msra.mxu0 %v665
    %683 = vmatprep.subr.mxu0 0.0
    %684 = vmatpush1.msra.mxu0 %v666
    %685 = vmatprep.subr.mxu0 0.0
    %686 = vmatpush1.msra.mxu0 %v667
    %687 = vmatprep.subr.mxu0 0.0
    %688 = vmatpush1.msra.mxu0 %v668
    %689 = vmatprep.subr.mxu0 0.0
    %690 = vmatpush1.msra.mxu0 %v669
    %691 = vmatprep.subr.mxu0 0.0
    %692 = vmatpush1.msra.mxu0 %v670
    %693 = vmatprep.subr.mxu0 0.0
    %694 = vmatpush1.msra.mxu0 %v671
    %695 = vmatprep.subr.mxu0 0.0
    %696 = vmatpush1.msra.mxu0 %v672
    %697 = vmatprep.subr.mxu0 0.0
    %698 = vmatpush1.msra.mxu0 %v673
    %699 = vmatprep.subr.mxu0 0.0
    %700 = vmatpush1.msra.mxu0 %v674
    %701 = vmatprep.subr.mxu0 0.0
    %702 = vmatpush1.msra.mxu0 %v675
    %703 = vmatprep.subr.mxu0 0.0
    %704 = vmatpush1.msra.mxu0 %v676
    %705 = vmatprep.subr.mxu0 0.0
    %706 = vmatpush1.msra.mxu0 %v677
    %707 = vmatprep.subr.mxu0 0.0
    %708 = vmatpush1.msra.mxu0 %v678
    %709 = vmatprep.subr.mxu0 0.0
    %710 = vmatpush1.msra.mxu0 %v679
    %711 = vmatprep.subr.mxu0 0.0
    %712 = vmatpush1.msra.mxu0 %v680
    %713 = vmatprep.subr.mxu0 0.0
    %714 = vmatpush1.msra.mxu0 0.0
    %715 = vmatprep.subr.mxu0 0.0
    %716 = vmatpush1.msra.mxu0 0.0
    %717 = vmatprep.subr.mxu0 0.0
    %718 = vmatpush1.msra.mxu0 0.0
    %719 = vmatprep.subr.mxu0 0.0
    %720 = vmatpush1.msra.mxu0 0.0
    %721 = vmatprep.subr.mxu0 0.0
    %722 = vmatpush1.msra.mxu0 0.0
    %723 = vmatprep.subr.mxu0 0.0
    %724 = vmatpush1.msra.mxu0 0.0
    %725 = vmatprep.subr.mxu0 0.0
    %726 = vmatpush1.msra.mxu0 0.0
    %727 = vmatprep.subr.mxu0 0.0
    %728 = vmatpush1.msra.mxu0 0.0
    %729 = vmatprep.subr.mxu0 0.0
    %730 = vmatpush1.msra.mxu0 0.0
    %731 = vmatprep.subr.mxu0 0.0
    %732 = vmatpush1.msra.mxu0 0.0
    %733 = vmatprep.subr.mxu0 0.0
    %734 = vmatpush1.msra.mxu0 0.0
    %735 = vmatprep.subr.mxu0 0.0
    %736 = vmatpush1.msra.mxu0 0.0
    %737 = vmatprep.subr.mxu0 0.0
    %738 = vmatpush1.msra.mxu0 0.0
    %739 = vmatprep.subr.mxu0 0.0
    %740 = vmatpush1.msra.mxu0 0.0
    %741 = vmatprep.subr.mxu0 0.0
    %742 = vmatpush1.msra.mxu0 0.0
    %743 = vmatprep.subr.mxu0 0.0
    %744 = vmatpush1.msra.mxu0 0.0
    %745 = vmatprep.mubr.f32.mxu0 0.0
    %746 = vmatmul.mubr.f32.gmra.mrb[0].mxu0 %v660
    %v747 = vpop.f32.mrb[0].mxu0
    %v748 = vadd.f32 0.0, %v747
    %v749 = vpop.f32.mrb[0].mxu0
    %750 = vmatprep.mubr.f32.mxu0 0.0
    %751 = vmatmul.mubr.f32.gmra.mrb[0].mxu0 %v661
    %v752 = vpop.f32.mrb[0].mxu0
    %v753 = vadd.f32 0.0, %v752
    %v754 = vpop.f32.mrb[0].mxu0
    %755 = vmatprep.mubr.f32.mxu0 0.0
    %756 = vmatmul.mubr.f32.gmra.mrb[0].mxu0 %v662
    %v757 = vpop.f32.mrb[0].mxu0
    %v758 = vadd.f32 0.0, %v757
    %v759 = vpop.f32.mrb[0].mxu0
    %760 = vmatprep.mubr.f32.mxu0 0.0
    %761 = vmatmul.mubr.f32.gmra.mrb[0].mxu0 %v663
    %v762 = vpop.f32.mrb[0].mxu0
    %v763 = vadd.f32 0.0, %v762
    %v764 = vpop.f32.mrb[0].mxu0
    %765 = vdwg.mxu0
    %v766 = vadd.f32 %v642, %v748
    %v767 = vadd.f32 %v647, %v753
    %v768 = vadd.f32 %v652, %v758
    %v769 = vadd.f32 %v657, %v763
    %v770 = vld [vmem:[#allocation3 + $0x3] sm:$0xff]
    %v771 = vld [vmem:[#allocation3 + $0xb] sm:$0xff]
    %v772 = vld [vmem:[#allocation3 + $0x1b] sm:$0xff]
    %v773 = vld [vmem:[#allocation3 + $0x23] sm:$0xff]
    %s774 = scalar_lea.vmem [#allocation9], 384
    %v775 = vld [vmem:[%s774] sm:$0xff]
    %v776 = vld [vmem:[%s774 + $0x8] sm:$0xff]
    %v777 = vld [vmem:[%s774 + $0x10] sm:$0xff]
    %v778 = vld [vmem:[%s774 + $0x18] sm:$0xff]
    %v779 = vld [vmem:[%s774 + $0x20] sm:$0xff]
    %v780 = vld [vmem:[%s774 + $0x28] sm:$0xff]
    %v781 = vld [vmem:[%s774 + $0x30] sm:$0xff]
    %v782 = vld [vmem:[%s774 + $0x38] sm:$0xff]
    %v783 = vld [vmem:[%s774 + $0x40] sm:$0xff]
    %v784 = vld [vmem:[%s774 + $0x48] sm:$0xff]
    %v785 = vld [vmem:[%s774 + $0x50] sm:$0xff]
    %v786 = vld [vmem:[%s774 + $0x58] sm:$0xff]
    %v787 = vld [vmem:[%s774 + $0x60] sm:$0xff]
    %v788 = vld [vmem:[%s774 + $0x68] sm:$0xff]
    %v789 = vld [vmem:[%s774 + $0x70] sm:$0xff]
    %v790 = vld [vmem:[%s774 + $0x78] sm:$0xff]
    %791 = vmatprep.subr.mxu0 0.0
    %792 = vmatpush1.msra.mxu0 %v775
    %793 = vmatprep.subr.mxu0 0.0
    %794 = vmatpush1.msra.mxu0 %v776
    %795 = vmatprep.subr.mxu0 0.0
    %796 = vmatpush1.msra.mxu0 %v777
    %797 = vmatprep.subr.mxu0 0.0
    %798 = vmatpush1.msra.mxu0 %v778
    %799 = vmatprep.subr.mxu0 0.0
    %800 = vmatpush1.msra.mxu0 %v779
    %801 = vmatprep.subr.mxu0 0.0
    %802 = vmatpush1.msra.mxu0 %v780
    %803 = vmatprep.subr.mxu0 0.0
    %804 = vmatpush1.msra.mxu0 %v781
    %805 = vmatprep.subr.mxu0 0.0
    %806 = vmatpush1.msra.mxu0 %v782
    %807 = vmatprep.subr.mxu0 0.0
    %808 = vmatpush1.msra.mxu0 %v783
    %809 = vmatprep.subr.mxu0 0.0
    %810 = vmatpush1.msra.mxu0 %v784
    %811 = vmatprep.subr.mxu0 0.0
    %812 = vmatpush1.msra.mxu0 %v785
    %813 = vmatprep.subr.mxu0 0.0
    %814 = vmatpush1.msra.mxu0 %v786
    %815 = vmatprep.subr.mxu0 0.0
    %816 = vmatpush1.msra.mxu0 %v787
    %817 = vmatprep.subr.mxu0 0.0
    %818 = vmatpush1.msra.mxu0 %v788
    %819 = vmatprep.subr.mxu0 0.0
    %820 = vmatpush1.msra.mxu0 %v789
    %821 = vmatprep.subr.mxu0 0.0
    %822 = vmatpush1.msra.mxu0 %v790
    %823 = vmatprep.subr.mxu0 0.0
    %824 = vmatpush1.msra.mxu0 0.0
    %825 = vmatprep.subr.mxu0 0.0
    %826 = vmatpush1.msra.mxu0 0.0
    %827 = vmatprep.subr.mxu0 0.0
    %828 = vmatpush1.msra.mxu0 0.0
    %829 = vmatprep.subr.mxu0 0.0
    %830 = vmatpush1.msra.mxu0 0.0
    %831 = vmatprep.subr.mxu0 0.0
    %832 = vmatpush1.msra.mxu0 0.0
    %833 = vmatprep.subr.mxu0 0.0
    %834 = vmatpush1.msra.mxu0 0.0
    %835 = vmatprep.subr.mxu0 0.0
    %836 = vmatpush1.msra.mxu0 0.0
    %837 = vmatprep.subr.mxu0 0.0
    %838 = vmatpush1.msra.mxu0 0.0
    %839 = vmatprep.subr.mxu0 0.0
    %840 = vmatpush1.msra.mxu0 0.0
    %841 = vmatprep.subr.mxu0 0.0
    %842 = vmatpush1.msra.mxu0 0.0
    %843 = vmatprep.subr.mxu0 0.0
    %844 = vmatpush1.msra.mxu0 0.0
    %845 = vmatprep.subr.mxu0 0.0
    %846 = vmatpush1.msra.mxu0 0.0
    %847 = vmatprep.subr.mxu0 0.0
    %848 = vmatpush1.msra.mxu0 0.0
    %849 = vmatprep.subr.mxu0 0.0
    %850 = vmatpush1.msra.mxu0 0.0
    %851 = vmatprep.subr.mxu0 0.0
    %852 = vmatpush1.msra.mxu0 0.0
    %853 = vmatprep.subr.mxu0 0.0
    %854 = vmatpush1.msra.mxu0 0.0
    %855 = vmatprep.mubr.f32.mxu0 0.0
    %856 = vmatmul.mubr.f32.gmra.mrb[0].mxu0 %v770
    %v857 = vpop.f32.mrb[0].mxu0
    %v858 = vadd.f32 0.0, %v857
    %v859 = vpop.f32.mrb[0].mxu0
    %860 = vmatprep.mubr.f32.mxu0 0.0
    %861 = vmatmul.mubr.f32.gmra.mrb[0].mxu0 %v771
    %v862 = vpop.f32.mrb[0].mxu0
    %v863 = vadd.f32 0.0, %v862
    %v864 = vpop.f32.mrb[0].mxu0
    %865 = vmatprep.mubr.f32.mxu0 0.0
    %866 = vmatmul.mubr.f32.gmra.mrb[0].mxu0 %v772
    %v867 = vpop.f32.mrb[0].mxu0
    %v868 = vadd.f32 0.0, %v867
    %v869 = vpop.f32.mrb[0].mxu0
    %870 = vmatprep.mubr.f32.mxu0 0.0
    %871 = vmatmul.mubr.f32.gmra.mrb[0].mxu0 %v773
    %v872 = vpop.f32.mrb[0].mxu0
    %v873 = vadd.f32 0.0, %v872
    %v874 = vpop.f32.mrb[0].mxu0
    %875 = vdwg.mxu0
    %v876 = vadd.f32 %v766, %v858
    %v877 = vadd.f32 %v767, %v863
    %v878 = vadd.f32 %v768, %v868
    %v879 = vadd.f32 %v769, %v873
    %v880 = vld [vmem:[#allocation3 + $0x4] sm:$0xff]
    %v881 = vld [vmem:[#allocation3 + $0xc] sm:$0xff]
    %v882 = vld [vmem:[#allocation3 + $0x1c] sm:$0xff]
    %v883 = vld [vmem:[#allocation3 + $0x24] sm:$0xff]
    %s884 = scalar_lea.vmem [#allocation9], 512
    %v885 = vld [vmem:[%s884] sm:$0xff]
    %v886 = vld [vmem:[%s884 + $0x8] sm:$0xff]
    %v887 = vld [vmem:[%s884 + $0x10] sm:$0xff]
    %v888 = vld [vmem:[%s884 + $0x18] sm:$0xff]
    %v889 = vld [vmem:[%s884 + $0x20] sm:$0xff]
    %v890 = vld [vmem:[%s884 + $0x28] sm:$0xff]
    %v891 = vld [vmem:[%s884 + $0x30] sm:$0xff]
    %v892 = vld [vmem:[%s884 + $0x38] sm:$0xff]
    %v893 = vld [vmem:[%s884 + $0x40] sm:$0xff]
    %v894 = vld [vmem:[%s884 + $0x48] sm:$0xff]
    %v895 = vld [vmem:[%s884 + $0x50] sm:$0xff]
    %v896 = vld [vmem:[%s884 + $0x58] sm:$0xff]
    %v897 = vld [vmem:[%s884 + $0x60] sm:$0xff]
    %v898 = vld [vmem:[%s884 + $0x68] sm:$0xff]
    %v899 = vld [vmem:[%s884 + $0x70] sm:$0xff]
    %v900 = vld [vmem:[%s884 + $0x78] sm:$0xff]
    %901 = vmatprep.subr.mxu0 0.0
    %902 = vmatpush1.msra.mxu0 %v885
    %903 = vmatprep.subr.mxu0 0.0
    %904 = vmatpush1.msra.mxu0 %v886
    %905 = vmatprep.subr.mxu0 0.0
    %906 = vmatpush1.msra.mxu0 %v887
    %907 = vmatprep.subr.mxu0 0.0
    %908 = vmatpush1.msra.mxu0 %v888
    %909 = vmatprep.subr.mxu0 0.0
    %910 = vmatpush1.msra.mxu0 %v889
    %911 = vmatprep.subr.mxu0 0.0
    %912 = vmatpush1.msra.mxu0 %v890
    %913 = vmatprep.subr.mxu0 0.0
    %914 = vmatpush1.msra.mxu0 %v891
    %915 = vmatprep.subr.mxu0 0.0
    %916 = vmatpush1.msra.mxu0 %v892
    %917 = vmatprep.subr.mxu0 0.0
    %918 = vmatpush1.msra.mxu0 %v893
    %919 = vmatprep.subr.mxu0 0.0
    %920 = vmatpush1.msra.mxu0 %v894
    %921 = vmatprep.subr.mxu0 0.0
    %922 = vmatpush1.msra.mxu0 %v895
    %923 = vmatprep.subr.mxu0 0.0
    %924 = vmatpush1.msra.mxu0 %v896
    %925 = vmatprep.subr.mxu0 0.0
    %926 = vmatpush1.msra.mxu0 %v897
    %927 = vmatprep.subr.mxu0 0.0
    %928 = vmatpush1.msra.mxu0 %v898
    %929 = vmatprep.subr.mxu0 0.0
    %930 = vmatpush1.msra.mxu0 %v899
    %931 = vmatprep.subr.mxu0 0.0
    %932 = vmatpush1.msra.mxu0 %v900
    %933 = vmatprep.subr.mxu0 0.0
    %934 = vmatpush1.msra.mxu0 0.0
    %935 = vmatprep.subr.mxu0 0.0
    %936 = vmatpush1.msra.mxu0 0.0
    %937 = vmatprep.subr.mxu0 0.0
    %938 = vmatpush1.msra.mxu0 0.0
    %939 = vmatprep.subr.mxu0 0.0
    %940 = vmatpush1.msra.mxu0 0.0
    %941 = vmatprep.subr.mxu0 0.0
    %942 = vmatpush1.msra.mxu0 0.0
    %943 = vmatprep.subr.mxu0 0.0
    %944 = vmatpush1.msra.mxu0 0.0
    %945 = vmatprep.subr.mxu0 0.0
    %946 = vmatpush1.msra.mxu0 0.0
    %947 = vmatprep.subr.mxu0 0.0
    %948 = vmatpush1.msra.mxu0 0.0
    %949 = vmatprep.subr.mxu0 0.0
    %950 = vmatpush1.msra.mxu0 0.0
    %951 = vmatprep.subr.mxu0 0.0
    %952 = vmatpush1.msra.mxu0 0.0
    %953 = vmatprep.subr.mxu0 0.0
    %954 = vmatpush1.msra.mxu0 0.0
    %955 = vmatprep.subr.mxu0 0.0
    %956 = vmatpush1.msra.mxu0 0.0
    %957 = vmatprep.subr.mxu0 0.0
    %958 = vmatpush1.msra.mxu0 0.0
    %959 = vmatprep.subr.mxu0 0.0
    %960 = vmatpush1.msra.mxu0 0.0
    %961 = vmatprep.subr.mxu0 0.0
    %962 = vmatpush1.msra.mxu0 0.0
    %963 = vmatprep.subr.mxu0 0.0
    %964 = vmatpush1.msra.mxu0 0.0
    %965 = vmatprep.mubr.f32.mxu0 0.0
    %966 = vmatmul.mubr.f32.gmra.mrb[0].mxu0 %v880
    %v967 = vpop.f32.mrb[0].mxu0
    %v968 = vadd.f32 0.0, %v967
    %v969 = vpop.f32.mrb[0].mxu0
    %970 = vmatprep.mubr.f32.mxu0 0.0
    %971 = vmatmul.mubr.f32.gmra.mrb[0].mxu0 %v881
    %v972 = vpop.f32.mrb[0].mxu0
    %v973 = vadd.f32 0.0, %v972
    %v974 = vpop.f32.mrb[0].mxu0
    %975 = vmatprep.mubr.f32.mxu0 0.0
    %976 = vmatmul.mubr.f32.gmra.mrb[0].mxu0 %v882
    %v977 = vpop.f32.mrb[0].mxu0
    %v978 = vadd.f32 0.0, %v977
    %v979 = vpop.f32.mrb[0].mxu0
    %980 = vmatprep.mubr.f32.mxu0 0.0
    %981 = vmatmul.mubr.f32.gmra.mrb[0].mxu0 %v883
    %v982 = vpop.f32.mrb[0].mxu0
    %v983 = vadd.f32 0.0, %v982
    %v984 = vpop.f32.mrb[0].mxu0
    %985 = vdwg.mxu0
    %v986 = vadd.f32 %v876, %v968
    %v987 = vadd.f32 %v877, %v973
    %v988 = vadd.f32 %v878, %v978
    %v989 = vadd.f32 %v879, %v983
    %v990 = vld [vmem:[%s4] sm:$0x1]
    %v992 = vlaneseq
    %v993 = vshrl.u32 %v992, 7
    %v994 = vsub.s32 0, %v993
    %v995 = vrot.slane %v990, %v994
    %v997 = vadd.f32 %v986, %v995
    %v998 = vadd.f32 %v987, %v995
    %v999 = vadd.f32 %v988, %v995
    %v1000 = vadd.f32 %v989, %v995
    %v1001 = vld [vmem:[#allocation4] sm:$0xff]
    %v1002 = vld [vmem:[#allocation4 + $0x8] sm:$0xff]
    %v1003 = vld [vmem:[#allocation4 + $0x10] sm:$0xff]
    %v1004 = vld [vmem:[#allocation4 + $0x18] sm:$0xff]
    %v1005 = vld [vmem:[#allocation10] sm:$0xff]
    %v1006 = vld [vmem:[#allocation10 + $0x8] sm:$0xff]
    %v1007 = vld [vmem:[#allocation10 + $0x10] sm:$0xff]
    %v1008 = vld [vmem:[#allocation10 + $0x18] sm:$0xff]
    %v1009 = vld [vmem:[#allocation10 + $0x20] sm:$0xff]
    %v1010 = vld [vmem:[#allocation10 + $0x28] sm:$0xff]
    %v1011 = vld [vmem:[#allocation10 + $0x30] sm:$0xff]
    %v1012 = vld [vmem:[#allocation10 + $0x38] sm:$0xff]
    %v1014 = vsel %vm88, %v1001, 0
    %v1017 = vsel %vm88, %v1002, 0
    %v1020 = vsel %vm88, %v1003, 0
    %v1023 = vsel %vm88, %v1004, 0
    %1025 = vmatprep.subr.mxu0 0.0
    %1026 = vmatpush1.msra.mxu0 %v1005
    %1027 = vmatprep.subr.mxu0 0.0
    %1028 = vmatpush1.msra.mxu0 %v1006
    %1029 = vmatprep.subr.mxu0 0.0
    %1030 = vmatpush1.msra.mxu0 %v1007
    %1031 = vmatprep.subr.mxu0 0.0
    %1032 = vmatpush1.msra.mxu0 %v1008
    %1033 = vmatprep.subr.mxu0 0.0
    %1034 = vmatpush1.msra.mxu0 %v1009
    %1035 = vmatprep.subr.mxu0 0.0
    %1036 = vmatpush1.msra.mxu0 %v1010
    %1037 = vmatprep.subr.mxu0 0.0
    %1038 = vmatpush1.msra.mxu0 %v1011
    %1039 = vmatprep.subr.mxu0 0.0
    %1040 = vmatpush1.msra.mxu0 %v1012
    %1041 = vmatprep.subr.mxu0 0.0
    %1042 = vmatpush1.msra.mxu0 0.0
    %1043 = vmatprep.subr.mxu0 0.0
    %1044 = vmatpush1.msra.mxu0 0.0
    %1045 = vmatprep.subr.mxu0 0.0
    %1046 = vmatpush1.msra.mxu0 0.0
    %1047 = vmatprep.subr.mxu0 0.0
    %1048 = vmatpush1.msra.mxu0 0.0
    %1049 = vmatprep.subr.mxu0 0.0
    %1050 = vmatpush1.msra.mxu0 0.0
    %1051 = vmatprep.subr.mxu0 0.0
    %1052 = vmatpush1.msra.mxu0 0.0
    %1053 = vmatprep.subr.mxu0 0.0
    %1054 = vmatpush1.msra.mxu0 0.0
    %1055 = vmatprep.subr.mxu0 0.0
    %1056 = vmatpush1.msra.mxu0 0.0
    %1057 = vmatprep.subr.mxu0 0.0
    %1058 = vmatpush1.msra.mxu0 0.0
    %1059 = vmatprep.subr.mxu0 0.0
    %1060 = vmatpush1.msra.mxu0 0.0
    %1061 = vmatprep.subr.mxu0 0.0
    %1062 = vmatpush1.msra.mxu0 0.0
    %1063 = vmatprep.subr.mxu0 0.0
    %1064 = vmatpush1.msra.mxu0 0.0
    %1065 = vmatprep.subr.mxu0 0.0
    %1066 = vmatpush1.msra.mxu0 0.0
    %1067 = vmatprep.subr.mxu0 0.0
    %1068 = vmatpush1.msra.mxu0 0.0
    %1069 = vmatprep.subr.mxu0 0.0
    %1070 = vmatpush1.msra.mxu0 0.0
    %1071 = vmatprep.subr.mxu0 0.0
    %1072 = vmatpush1.msra.mxu0 0.0
    %1073 = vmatprep.subr.mxu0 0.0
    %1074 = vmatpush1.msra.mxu0 0.0
    %1075 = vmatprep.subr.mxu0 0.0
    %1076 = vmatpush1.msra.mxu0 0.0
    %1077 = vmatprep.subr.mxu0 0.0
    %1078 = vmatpush1.msra.mxu0 0.0
    %1079 = vmatprep.subr.mxu0 0.0
    %1080 = vmatpush1.msra.mxu0 0.0
    %1081 = vmatprep.subr.mxu0 0.0
    %1082 = vmatpush1.msra.mxu0 0.0
    %1083 = vmatprep.subr.mxu0 0.0
    %1084 = vmatpush1.msra.mxu0 0.0
    %1085 = vmatprep.subr.mxu0 0.0
    %1086 = vmatpush1.msra.mxu0 0.0
    %1087 = vmatprep.subr.mxu0 0.0
    %1088 = vmatpush1.msra.mxu0 0.0
    %1089 = vmatprep.mubr.f32.mxu0 0.0
    %1090 = vmatmul.mubr.f32.gmra.mrb[0].mxu0 %v1014
    %v1091 = vpop.f32.mrb[0].mxu0
    %v1092 = vadd.f32 0.0, %v1091
    %v1093 = vpop.f32.mrb[0].mxu0
    %1094 = vmatprep.mubr.f32.mxu0 0.0
    %1095 = vmatmul.mubr.f32.gmra.mrb[0].mxu0 %v1017
    %v1096 = vpop.f32.mrb[0].mxu0
    %v1097 = vadd.f32 0.0, %v1096
    %v1098 = vpop.f32.mrb[0].mxu0
    %1099 = vmatprep.mubr.f32.mxu0 0.0
    %1100 = vmatmul.mubr.f32.gmra.mrb[0].mxu0 %v1020
    %v1101 = vpop.f32.mrb[0].mxu0
    %v1102 = vadd.f32 0.0, %v1101
    %v1103 = vpop.f32.mrb[0].mxu0
    %1104 = vmatprep.mubr.f32.mxu0 0.0
    %1105 = vmatmul.mubr.f32.gmra.mrb[0].mxu0 %v1023
    %v1106 = vpop.f32.mrb[0].mxu0
    %v1107 = vadd.f32 0.0, %v1106
    %v1108 = vpop.f32.mrb[0].mxu0
    %1109 = vdwg.mxu0
    %v1110 = vadd.f32 %v997, %v1092
    %v1111 = vadd.f32 %v998, %v1097
    %v1112 = vadd.f32 %v999, %v1102
    %v1113 = vadd.f32 %v1000, %v1107
    %v1114 = vmax.f32 %v1110, 0.0
    %v1115 = vmax.f32 %v1111, 0.0
    %v1116 = vmax.f32 %v1112, 0.0
    %v1117 = vmax.f32 %v1113, 0.0
    %1118 = vst [vmem:[#allocation12] sm:$0xff] %v1114
    %1119 = vst [vmem:[#allocation12 + $0x8] sm:$0xff] %v1115
    %1120 = vst [vmem:[#allocation12 + $0x10] sm:$0xff] %v1116
    %1121 = vst [vmem:[#allocation12 + $0x18] sm:$0xff] %v1117
    // Predicated region
    $region42: #{tpu_custom_call.1} parent=1 // pred_check
      _
    $region43: #{tpu_custom_call.1} parent=1 // pred_check_branch
      %1123 = sbr.rel (0) target = $region45
    $region44: #{tpu_custom_call.1} parent=1 // pred_region
      %s1125 = ssub.s32 512, 512
      %1126 = vsyncadd [#allocation6], %s1125
      %s1127 = sshll.u32 [#allocation12], 4
      %s1128 = int_to_ptr.vmem [resolvable:$true] %s1127
      %1133 = dma.vmem_to_hbm [thread:$0]  %s1128, 512, %s6, [#allocation6], 128, 128, 8
    $region45: #{tpu_custom_call.1} parent=1 // pred_fallthru
      _
    // Predicated region
    $region46: #{tpu_custom_call.1} parent=1 // pred_check
      _
    $region47: #{tpu_custom_call.1} parent=1 // pred_check_branch
      %1135 = sbr.rel (0) target = $region49
    $region48: #{tpu_custom_call.1} parent=1 // pred_region
      %1136 = dma.done [#allocation6], 512
    $region49: #{tpu_custom_call.1} parent=1 // pred_fallthru
      _
    %1137 = vsyncpa [#allocation5], 1
    %1138 = vsyncpa [#allocation8], 1
    %1139 = vsyncpa [#allocation11], 1
    %1140 = vsyncpa [#allocation6], 1

</llo_original>
